<compile_context>
chip_gen: v5e
topology: v5e:2x2
jax: 0.10.0
libtpu: 0.0.40
codegen_flags: <defaults>
</compile_context>

<pallas_src>
import jax
import jax.numpy as jnp
from jax import lax
from jax.experimental import pallas as pl
from jax.experimental.pallas import tpu as pltpu

LANE = 128


def same_padding(input_size, kernel_size, stride_size):
    return (input_size - 1 - (input_size - kernel_size // stride_size)) // 2


def _round_up(x, m):
    return ((x + m - 1) // m) * m


def _pick_row_tile(Ho, Wo, target_rows=1024):
    """Largest row-chunk TH dividing Ho with TH*Wo <= target and TH*Wo % 8 == 0
    (8-aligned chunk M keeps the (TH,Wo,C)->(M,C) reshape relayout-free).
    Falls back to whole-image chunks when no such TH exists."""
    cands = [th for th in range(1, Ho + 1)
             if Ho % th == 0 and (th * Wo) % 8 == 0 and th * Wo <= target_rows]
    return max(cands) if cands else Ho


def _loop_chunks(n_chunks, body):
    """Run body(c) for c in [0, n_chunks).  Uses lax.fori_loop (not a Python
    for) so per-chunk live ranges stay bounded; trivial case inlined."""
    if n_chunks <= 1:
        body(0)
    else:
        def wrapped(c, carry):
            body(c)
            return carry
        lax.fori_loop(0, n_chunks, wrapped, 0)


# ---------------------------------------------------------------------------
# Pallas kernel: one image per grid step of the fused bottleneck:
#   conv1/bn1/relu -> conv2(3x3, accumulated taps)/bn2/relu
#   -> (conv3/bn3 + conv_sc/bn_sc) accumulated, residual relu, bf16 store.
# ---------------------------------------------------------------------------
def _make_bottleneck_kernel(th):
    def kernel(x_ref,                 # (1, Ho, Wo, Cin_p)  bf16
               w1_ref, t1_ref,        # (Cin_p, Cp) bf16, (1, Cp) f32
               w2_ref, t2_ref,        # (9, Cp, Cp) bf16, (1, Cp) f32
               w3_ref,                # (Cp, Cout_p) bf16
               wsc_ref,               # (Cin_p, Cout_p) bf16
               t3sc_ref,              # (1, Cout_p) f32  (= t3 + t_sc)
               out_ref,               # (1, Ho, Wo, Cout_p) bf16
               y1p_ref):              # (Ho+2, Wo+2, Cp) bf16 VMEM scratch
        _, Ho, Wo, Cin_p = x_ref.shape
        Cp = w1_ref.shape[1]
        Cout_p = w3_ref.shape[1]
        n_chunks = Ho // th
        mc = th * Wo

        # --- zero the 1-wide halo of the bf16 scratch (thin strips, every step:
        #     with the batch axis "parallel" a second core never sees step 0, so
        #     a one-shot init would leave its halo uninitialized). -------------
        y1p_ref[pl.ds(0, 1), :, :] = jnp.zeros((1, Wo + 2, Cp), jnp.bfloat16)
        y1p_ref[pl.ds(Ho + 1, 1), :, :] = jnp.zeros((1, Wo + 2, Cp), jnp.bfloat16)
        y1p_ref[pl.ds(1, Ho), pl.ds(0, 1), :] = jnp.zeros((Ho, 1, Cp), jnp.bfloat16)
        y1p_ref[pl.ds(1, Ho), pl.ds(Wo + 1, 1), :] = jnp.zeros((Ho, 1, Cp), jnp.bfloat16)

        # --- pass 1: conv1 (1x1, folded bias+BN) + relu, per row chunk, stored
        #     once as bf16 into the scratch interior (no f32 staging, no re-casts).
        def fill_chunk(c):
            r0 = c * th
            xc = x_ref[0, pl.ds(r0, th), :, :].reshape(mc, Cin_p)
            y1 = jnp.dot(xc, w1_ref[...], preferred_element_type=jnp.float32)
            y1 = jnp.maximum(y1 + t1_ref[...], 0.0)
            y1p_ref[pl.ds(r0 + 1, th), pl.ds(1, Wo), :] = (
                y1.astype(jnp.bfloat16).reshape(th, Wo, Cp))

        _loop_chunks(n_chunks, fill_chunk)

        # --- pass 2: per row chunk: conv2 as 9 accumulating tap matmuls,
        #     then conv3 + shortcut accumulated into one f32 result, residual
        #     relu, bf16 store.  Nothing full-image stays live. ---------------
        def compute_chunk(c):
            r0 = c * th
            # conv2 (3x3): accumulate dot(patch, w2[tap]) -- no im2col concat.
            y2_acc = None
            for t in range(9):
                dh, dw = divmod(t, 3)
                patch = y1p_ref[pl.ds(r0 + dh, th), pl.ds(dw, Wo), :]
                contrib = jnp.dot(patch.reshape(mc, Cp), w2_ref[t],
                                  preferred_element_type=jnp.float32)
                y2_acc = contrib if y2_acc is None else y2_acc + contrib
            y2 = jnp.maximum(y2_acc + t2_ref[...], 0.0).astype(jnp.bfloat16)

            # conv3 + projection shortcut accumulated together (shifts pre-summed
            # in the wrapper), then residual relu.
            xc = x_ref[0, pl.ds(r0, th), :, :].reshape(mc, Cin_p)
            y3 = jnp.dot(y2, w3_ref[...], preferred_element_type=jnp.float32)
            y3 = y3 + jnp.dot(xc, wsc_ref[...], preferred_element_type=jnp.float32)
            out = jnp.maximum(y3 + t3sc_ref[...], 0.0)
            out_ref[0, pl.ds(r0, th), :, :] = (
                out.astype(jnp.bfloat16).reshape(th, Wo, Cout_p))

        _loop_chunks(n_chunks, compute_chunk)

    return kernel


# ---------------------------------------------------------------------------
# Wrapper: layout/stride handling, bias+BN folding, channel padding, plumbing.
# ---------------------------------------------------------------------------
def _fold_conv_bn(w, b, bn, eps=1e-5):
    """Fold conv bias + eval-mode BatchNorm into (scaled weight, shift)."""
    gamma, beta, mean, var = bn
    s = gamma * lax.rsqrt(var + eps)
    t = beta - mean * s + b * s
    return w * s, t            # s broadcasts over the output-channel (last) axis


def _pad2d(w, rows, cols, dtype):
    return jnp.zeros((rows, cols), dtype).at[:w.shape[0], :w.shape[1]].set(
        w.astype(dtype))


def _pad_shift(t, cols):
    return jnp.zeros((1, cols), jnp.float32).at[:, :t.shape[0]].set(
        t.astype(jnp.float32))


def bottleneck1_forward(x_nchw, params, stride):
    # The 1x1-conv stride is pure spatial subsampling; the strided slice on NCHW
    # fuses with the (required anyway) NCHW->NHWC transpose in XLA.
    xs = jnp.transpose(x_nchw[:, :, ::stride, ::stride], (0, 2, 3, 1))
    xs = xs.astype(jnp.bfloat16)
    N, Ho, Wo, Cin = xs.shape
    C = params["w1"].shape[1]
    Cout = params["w3"].shape[1]

    Cin_p = _round_up(Cin, LANE)
    Cp = _round_up(C, LANE)
    Cout_p = _round_up(Cout, LANE)

    xs_p = jnp.zeros((N, Ho, Wo, Cin_p), jnp.bfloat16).at[..., :Cin].set(xs)

    w1, t1 = _fold_conv_bn(params["w1"], params["b1"], params["bn1"])
    w2, t2 = _fold_conv_bn(params["w2"], params["b2"], params["bn2"])
    w3, t3 = _fold_conv_bn(params["w3"], params["b3"], params["bn3"])
    wsc, tsc = _fold_conv_bn(params["w_sc"], params["b_sc"], params["bn_sc"])

    w1p = _pad2d(w1, Cin_p, Cp, jnp.bfloat16)
    w3p = _pad2d(w3, Cp, Cout_p, jnp.bfloat16)
    wscp = _pad2d(wsc, Cin_p, Cout_p, jnp.bfloat16)
    # 3x3 HWIO weight -> (9, Cp, Cp); tap order (dh, dw) matches the kernel loop.
    w2p = jnp.zeros((3, 3, Cp, Cp), jnp.bfloat16).at[:, :, :C, :C].set(
        w2.astype(jnp.bfloat16)).reshape(9, Cp, Cp)

    t1p = _pad_shift(t1, Cp)
    t2p = _pad_shift(t2, Cp)
    t3scp = _pad_shift(t3 + tsc, Cout_p)      # conv3 + shortcut shifts pre-summed

    TH = _pick_row_tile(Ho, Wo)

    # --- cost estimate (advisory) -------------------------------------------
    M_total = N * Ho * Wo
    flops = 2 * M_total * (Cin_p * Cp + 9 * Cp * Cp + Cp * Cout_p
                           + Cin_p * Cout_p)
    bytes_accessed = (xs_p.size * 2
                      + (w1p.size + w2p.size + w3p.size + wscp.size) * 2
                      + (t1p.size + t2p.size + t3scp.size) * 4
                      + M_total * Cout_p * 2)

    # --- explicit VMEM budget (audited for v7x 64 MiB / v5e 16 MiB scoped) ---
    block_in = Ho * Wo * Cin_p * 2
    block_out = Ho * Wo * Cout_p * 2
    weight_bytes = ((w1p.size + w2p.size + w3p.size + wscp.size) * 2
                    + (t1p.size + t2p.size + t3scp.size) * 4)
    scratch_bytes = (Ho + 2) * (Wo + 2) * Cp * 2
    chunk_bytes = TH * Wo * (Cp + Cout_p) * 4 * 3     # per-chunk f32 temporaries
    est = (2 * (block_in + block_out) + 2 * weight_bytes
           + scratch_bytes + chunk_bytes)
    vmem_limit = int(min(max(2 * est, 16 << 20), 48 << 20))

    def const2(n):
        return (0, 0)

    def const3(n):
        return (0, 0, 0)

    out_p = pl.pallas_call(
        _make_bottleneck_kernel(TH),
        out_shape=jax.ShapeDtypeStruct((N, Ho, Wo, Cout_p), jnp.bfloat16),
        grid_spec=pltpu.PrefetchScalarGridSpec(
            num_scalar_prefetch=0,
            grid=(N,),
            in_specs=[
                pl.BlockSpec((1, Ho, Wo, Cin_p), lambda n: (n, 0, 0, 0)),
                pl.BlockSpec((Cin_p, Cp), const2),
                pl.BlockSpec((1, Cp), const2),
                pl.BlockSpec((9, Cp, Cp), const3),
                pl.BlockSpec((1, Cp), const2),
                pl.BlockSpec((Cp, Cout_p), const2),
                pl.BlockSpec((Cin_p, Cout_p), const2),
                pl.BlockSpec((1, Cout_p), const2),
            ],
            out_specs=pl.BlockSpec((1, Ho, Wo, Cout_p), lambda n: (n, 0, 0, 0)),
            scratch_shapes=[pltpu.VMEM((Ho + 2, Wo + 2, Cp), jnp.bfloat16)],
        ),
        compiler_params=pltpu.CompilerParams(
            dimension_semantics=("parallel",),
            vmem_limit_bytes=vmem_limit),
        cost_estimate=pl.CostEstimate(flops=int(flops), transcendentals=0,
                                      bytes_accessed=int(bytes_accessed)),
    )(xs_p, w1p, t1p, w2p, t2p, w3p, wscp, t3scp)

    out = out_p[..., :Cout]                    # drop padded channels
    # NHWC -> NCHW to match the PyTorch module; drop this transpose if the
    # downstream consumer accepts NHWC (it is a full extra HBM pass).
    return jnp.transpose(out, (0, 3, 1, 2))


# ---------------------------------------------------------------------------
# Deterministic parameter init (shapes implied by Bottleneck1.__init__).
# 1x1 conv weights stored as (Cin, Cout); 3x3 conv as HWIO (3, 3, C, C).
# ---------------------------------------------------------------------------
def init_params(key, in_channels, channels, out_channels):
    ks = jax.random.split(key, 20)

    def bn_params(k, c):
        k1, k2, k3, k4 = jax.random.split(k, 4)
        gamma = 1.0 + 0.1 * jax.random.normal(k1, (c,), jnp.float32)
        beta = 0.1 * jax.random.normal(k2, (c,), jnp.float32)
        mean = 0.1 * jax.random.normal(k3, (c,), jnp.float32)
        var = jax.random.uniform(k4, (c,), jnp.float32, 0.5, 1.5)
        return (gamma, beta, mean, var)

    return {
        "w1": 0.2 * jax.random.normal(ks[0], (in_channels, channels), jnp.float32),
        "b1": 0.1 * jax.random.normal(ks[1], (channels,), jnp.float32),
        "bn1": bn_params(ks[2], channels),
        "w2": 0.2 * jax.random.normal(ks[3], (3, 3, channels, channels), jnp.float32),
        "b2": 0.1 * jax.random.normal(ks[4], (channels,), jnp.float32),
        "bn2": bn_params(ks[5], channels),
        "w3": 0.2 * jax.random.normal(ks[6], (channels, out_channels), jnp.float32),
        "b3": 0.1 * jax.random.normal(ks[7], (out_channels,), jnp.float32),
        "bn3": bn_params(ks[8], out_channels),
        "w_sc": 0.2 * jax.random.normal(ks[9], (in_channels, out_channels), jnp.float32),
        "b_sc": 0.1 * jax.random.normal(ks[10], (out_channels,), jnp.float32),
        "bn_sc": bn_params(ks[11], out_channels),
    }


# ---------------------------------------------------------------------------
# Pure-JAX f32 reference (lax.conv) matching the PyTorch module semantics.
# ---------------------------------------------------------------------------
def reference_forward(x_nchw, params, stride, eps=1e-5):
    x = jnp.transpose(x_nchw, (0, 2, 3, 1)).astype(jnp.float32)

    def conv(inp, w_hwio, b, s, padding):
        y = lax.conv_general_dilated(
            inp, w_hwio, (s, s), padding,
            dimension_numbers=("NHWC", "HWIO", "NHWC"))
        return y + b.reshape(1, 1, 1, -1)

    def bn(inp, p):
        gamma, beta, mean, var = p
        return gamma * (inp - mean) * lax.rsqrt(var + eps) + beta

    w1 = params["w1"].reshape(1, 1, *params["w1"].shape)
    w3 = params["w3"].reshape(1, 1, *params["w3"].shape)
    wsc = params["w_sc"].reshape(1, 1, *params["w_sc"].shape)

    pad2 = same_padding((x.shape[1] - 1) // stride + 1, 3, 1)

    y = jax.nn.relu(bn(conv(x, w1, params["b1"], stride, "VALID"), params["bn1"]))
    y = jax.nn.relu(bn(conv(y, params["w2"], params["b2"], 1,
                            [(pad2, pad2), (pad2, pad2)]), params["bn2"]))
    y = bn(conv(y, w3, params["b3"], 1, "VALID"), params["bn3"])
    sc = bn(conv(x, wsc, params["b_sc"], stride, "VALID"), params["bn_sc"])
    return jnp.transpose(jax.nn.relu(y + sc), (0, 3, 1, 2))


if __name__ == "__main__":
    key = jax.random.PRNGKey(0)
    k_x, k_p = jax.random.split(key)

    # Small shapes consistent with the module: NCHW input.
    N, Cin, H = 2, 4, 16
    C, Cout, stride = 4, 8, 2

    x = jax.random.normal(k_x, (N, Cin, H, H), jnp.float32)
    params = init_params(k_p, Cin, C, Cout)

    out = jax.block_until_ready(bottleneck1_forward(x, params, stride))

    ref = reference_forward(x, params, stride)
    assert out.shape == ref.shape, (out.shape, ref.shape)
    max_err = float(jnp.max(jnp.abs(out - ref)))
    denom = float(jnp.max(jnp.abs(ref))) + 1e-6
    rel_err = max_err / denom
    # bf16 MXU matmuls (f32 accumulation) + bf16 output store -> relative tol.
    assert rel_err < 3e-2, f"relative err {rel_err:.5f} (abs {max_err:.5f})"

    print("KERNEL_OK")
</pallas_src>

<mosaic_0001>
module attributes {stable_mosaic.version = 11 : i64} {
  func.func @kernel(%arg0: i32, %arg1: memref<1x8x8x128xbf16, #tpu.memory_space<vmem>>, %arg2: memref<128x128xbf16, #tpu.memory_space<vmem>>, %arg3: memref<1x128xf32, #tpu.memory_space<vmem>>, %arg4: memref<9x128x128xbf16, #tpu.memory_space<vmem>>, %arg5: memref<1x128xf32, #tpu.memory_space<vmem>>, %arg6: memref<128x128xbf16, #tpu.memory_space<vmem>>, %arg7: memref<128x128xbf16, #tpu.memory_space<vmem>>, %arg8: memref<1x128xf32, #tpu.memory_space<vmem>>, %arg9: memref<1x8x8x128xbf16, #tpu.memory_space<vmem>>, %arg10: memref<10x10x128xbf16, #tpu.memory_space<vmem>>) attributes {dimension_semantics = [#tpu.dimension_semantics<parallel>], iteration_bounds = array<i64: 2>, scalar_prefetch = 0 : i64, scratch_operands = 1 : i64, tpu.core_type = #tpu.core_type<tc>, window_params = [{transform_indices = @transform_0, window_bounds = array<i64: 1, 8, 8, 128>}, {pipeline_mode = #tpu.pipeline_mode<synchronous>, transform_indices = @transform_1, window_bounds = array<i64: 128, 128>}, {pipeline_mode = #tpu.pipeline_mode<synchronous>, transform_indices = @transform_2, window_bounds = array<i64: 1, 128>}, {pipeline_mode = #tpu.pipeline_mode<synchronous>, transform_indices = @transform_3, window_bounds = array<i64: 9, 128, 128>}, {pipeline_mode = #tpu.pipeline_mode<synchronous>, transform_indices = @transform_4, window_bounds = array<i64: 1, 128>}, {pipeline_mode = #tpu.pipeline_mode<synchronous>, transform_indices = @transform_5, window_bounds = array<i64: 128, 128>}, {pipeline_mode = #tpu.pipeline_mode<synchronous>, transform_indices = @transform_6, window_bounds = array<i64: 128, 128>}, {pipeline_mode = #tpu.pipeline_mode<synchronous>, transform_indices = @transform_7, window_bounds = array<i64: 1, 128>}, {transform_indices = @transform_8, window_bounds = array<i64: 1, 8, 8, 128>}]} {
    %cst = arith.constant 0.000000e+00 : bf16
    %0 = vector.broadcast %cst : bf16 to vector<1x10x128xbf16>
    %c0 = arith.constant 0 : index
    %c0_0 = arith.constant 0 : index
    %c0_1 = arith.constant 0 : index
    %1 = vector.load %arg10[%c0, %c0_0, %c0_1] : memref<10x10x128xbf16, #tpu.memory_space<vmem>>, vector<1x10x128xbf16>
    tpu.vector_store %arg10[%c0, %c0_0, %c0_1], %0 {strides = array<i32>} : memref<10x10x128xbf16, #tpu.memory_space<vmem>>, vector<1x10x128xbf16>,
    %cst_2 = arith.constant 0.000000e+00 : bf16
    %2 = vector.broadcast %cst_2 : bf16 to vector<1x10x128xbf16>
    %c9 = arith.constant 9 : index
    %c0_3 = arith.constant 0 : index
    %c0_4 = arith.constant 0 : index
    %3 = vector.load %arg10[%c9, %c0_3, %c0_4] : memref<10x10x128xbf16, #tpu.memory_space<vmem>>, vector<1x10x128xbf16>
    tpu.vector_store %arg10[%c9, %c0_3, %c0_4], %2 {strides = array<i32>} : memref<10x10x128xbf16, #tpu.memory_space<vmem>>, vector<1x10x128xbf16>,
    %cst_5 = arith.constant 0.000000e+00 : bf16
    %4 = vector.broadcast %cst_5 : bf16 to vector<8x1x128xbf16>
    %c1 = arith.constant 1 : index
    %c0_6 = arith.constant 0 : index
    %c0_7 = arith.constant 0 : index
    %5 = vector.load %arg10[%c1, %c0_6, %c0_7] : memref<10x10x128xbf16, #tpu.memory_space<vmem>>, vector<8x1x128xbf16>
    tpu.vector_store %arg10[%c1, %c0_6, %c0_7], %4 {strides = array<i32>} : memref<10x10x128xbf16, #tpu.memory_space<vmem>>, vector<8x1x128xbf16>,
    %cst_8 = arith.constant 0.000000e+00 : bf16
    %6 = vector.broadcast %cst_8 : bf16 to vector<8x1x128xbf16>
    %c1_9 = arith.constant 1 : index
    %c9_10 = arith.constant 9 : index
    %c0_11 = arith.constant 0 : index
    %7 = vector.load %arg10[%c1_9, %c9_10, %c0_11] : memref<10x10x128xbf16, #tpu.memory_space<vmem>>, vector<8x1x128xbf16>
    tpu.vector_store %arg10[%c1_9, %c9_10, %c0_11], %6 {strides = array<i32>} : memref<10x10x128xbf16, #tpu.memory_space<vmem>>, vector<8x1x128xbf16>,
    %c0_12 = arith.constant 0 : index
    %c0_13 = arith.constant 0 : index
    %c0_14 = arith.constant 0 : index
    %c0_15 = arith.constant 0 : index
    %8 = vector.load %arg1[%c0_12, %c0_13, %c0_14, %c0_15] : memref<1x8x8x128xbf16, #tpu.memory_space<vmem>>, vector<1x8x8x128xbf16>
    %9 = vector.shape_cast %8 : vector<1x8x8x128xbf16> to vector<8x8x128xbf16>
    %10 = vector.shape_cast %9 : vector<8x8x128xbf16> to vector<64x128xbf16>
    %c0_16 = arith.constant 0 : index
    %c0_17 = arith.constant 0 : index
    %11 = vector.load %arg2[%c0_16, %c0_17] : memref<128x128xbf16, #tpu.memory_space<vmem>>, vector<128x128xbf16>
    %cst_18 = arith.constant dense<0.000000e+00> : vector<64x128xf32>
    %12 = tpu.matmul %10, %11, %cst_18 {dimension_numbers = #tpu.dot_dimension_numbers<[1], [0], [0], [1], [0, 0, 1, 1], [], []>} : vector<64x128xbf16>, vector<128x128xbf16>, vector<64x128xf32> -> vector<64x128xf32>
    %c0_19 = arith.constant 0 : index
    %c0_20 = arith.constant 0 : index
    %13 = vector.load %arg3[%c0_19, %c0_20] : memref<1x128xf32, #tpu.memory_space<vmem>>, vector<1x128xf32>
    %14 = vector.broadcast %13 : vector<1x128xf32> to vector<64x128xf32>
    %15 = arith.addf %12, %14 : vector<64x128xf32>
    %cst_21 = arith.constant 0.000000e+00 : f32
    %16 = vector.broadcast %cst_21 : f32 to vector<64x128xf32>
    %17 = arith.maximumf %15, %16 : vector<64x128xf32>
    %18 = arith.truncf %17 : vector<64x128xf32> to vector<64x128xbf16>
    %19 = vector.shape_cast %18 : vector<64x128xbf16> to vector<8x8x128xbf16>
    %c1_22 = arith.constant 1 : index
    %c1_23 = arith.constant 1 : index
    %c0_24 = arith.constant 0 : index
    %20 = vector.load %arg10[%c1_22, %c1_23, %c0_24] : memref<10x10x128xbf16, #tpu.memory_space<vmem>>, vector<8x8x128xbf16>
    tpu.vector_store %arg10[%c1_22, %c1_23, %c0_24], %19 {strides = array<i32>} : memref<10x10x128xbf16, #tpu.memory_space<vmem>>, vector<8x8x128xbf16>,
    %c0_25 = arith.constant 0 : index
    %c0_26 = arith.constant 0 : index
    %c0_27 = arith.constant 0 : index
    %21 = vector.load %arg10[%c0_25, %c0_26, %c0_27] : memref<10x10x128xbf16, #tpu.memory_space<vmem>>, vector<8x8x128xbf16>
    %22 = vector.shape_cast %21 : vector<8x8x128xbf16> to vector<64x128xbf16>
    %c0_28 = arith.constant 0 : index
    %c0_29 = arith.constant 0 : index
    %c0_30 = arith.constant 0 : index
    %23 = vector.load %arg4[%c0_28, %c0_29, %c0_30] : memref<9x128x128xbf16, #tpu.memory_space<vmem>>, vector<1x128x128xbf16>
    %24 = vector.shape_cast %23 : vector<1x128x128xbf16> to vector<128x128xbf16>
    %cst_31 = arith.constant dense<0.000000e+00> : vector<64x128xf32>
    %25 = tpu.matmul %22, %24, %cst_31 {dimension_numbers = #tpu.dot_dimension_numbers<[1], [0], [0], [1], [0, 0, 1, 1], [], []>} : vector<64x128xbf16>, vector<128x128xbf16>, vector<64x128xf32> -> vector<64x128xf32>
    %c0_32 = arith.constant 0 : index
    %c1_33 = arith.constant 1 : index
    %c0_34 = arith.constant 0 : index
    %26 = vector.load %arg10[%c0_32, %c1_33, %c0_34] : memref<10x10x128xbf16, #tpu.memory_space<vmem>>, vector<8x8x128xbf16>
    %27 = vector.shape_cast %26 : vector<8x8x128xbf16> to vector<64x128xbf16>
    %c1_35 = arith.constant 1 : index
    %c0_36 = arith.constant 0 : index
    %c0_37 = arith.constant 0 : index
    %28 = vector.load %arg4[%c1_35, %c0_36, %c0_37] : memref<9x128x128xbf16, #tpu.memory_space<vmem>>, vector<1x128x128xbf16>
    %29 = vector.shape_cast %28 : vector<1x128x128xbf16> to vector<128x128xbf16>
    %cst_38 = arith.constant dense<0.000000e+00> : vector<64x128xf32>
    %30 = tpu.matmul %27, %29, %cst_38 {dimension_numbers = #tpu.dot_dimension_numbers<[1], [0], [0], [1], [0, 0, 1, 1], [], []>} : vector<64x128xbf16>, vector<128x128xbf16>, vector<64x128xf32> -> vector<64x128xf32>
    %31 = arith.addf %25, %30 : vector<64x128xf32>
    %c0_39 = arith.constant 0 : index
    %c2 = arith.constant 2 : index
    %c0_40 = arith.constant 0 : index
    %32 = vector.load %arg10[%c0_39, %c2, %c0_40] : memref<10x10x128xbf16, #tpu.memory_space<vmem>>, vector<8x8x128xbf16>
    %33 = vector.shape_cast %32 : vector<8x8x128xbf16> to vector<64x128xbf16>
    %c2_41 = arith.constant 2 : index
    %c0_42 = arith.constant 0 : index
    %c0_43 = arith.constant 0 : index
    %34 = vector.load %arg4[%c2_41, %c0_42, %c0_43] : memref<9x128x128xbf16, #tpu.memory_space<vmem>>, vector<1x128x128xbf16>
    %35 = vector.shape_cast %34 : vector<1x128x128xbf16> to vector<128x128xbf16>
    %cst_44 = arith.constant dense<0.000000e+00> : vector<64x128xf32>
    %36 = tpu.matmul %33, %35, %cst_44 {dimension_numbers = #tpu.dot_dimension_numbers<[1], [0], [0], [1], [0, 0, 1, 1], [], []>} : vector<64x128xbf16>, vector<128x128xbf16>, vector<64x128xf32> -> vector<64x128xf32>
    %37 = arith.addf %31, %36 : vector<64x128xf32>
    %c1_45 = arith.constant 1 : index
    %c0_46 = arith.constant 0 : index
    %c0_47 = arith.constant 0 : index
    %38 = vector.load %arg10[%c1_45, %c0_46, %c0_47] : memref<10x10x128xbf16, #tpu.memory_space<vmem>>, vector<8x8x128xbf16>
    %39 = vector.shape_cast %38 : vector<8x8x128xbf16> to vector<64x128xbf16>
    %c3 = arith.constant 3 : index
    %c0_48 = arith.constant 0 : index
    %c0_49 = arith.constant 0 : index
    %40 = vector.load %arg4[%c3, %c0_48, %c0_49] : memref<9x128x128xbf16, #tpu.memory_space<vmem>>, vector<1x128x128xbf16>
    %41 = vector.shape_cast %40 : vector<1x128x128xbf16> to vector<128x128xbf16>
    %cst_50 = arith.constant dense<0.000000e+00> : vector<64x128xf32>
    %42 = tpu.matmul %39, %41, %cst_50 {dimension_numbers = #tpu.dot_dimension_numbers<[1], [0], [0], [1], [0, 0, 1, 1], [], []>} : vector<64x128xbf16>, vector<128x128xbf16>, vector<64x128xf32> -> vector<64x128xf32>
    %43 = arith.addf %37, %42 : vector<64x128xf32>
    %c1_51 = arith.constant 1 : index
    %c1_52 = arith.constant 1 : index
    %c0_53 = arith.constant 0 : index
    %44 = vector.load %arg10[%c1_51, %c1_52, %c0_53] : memref<10x10x128xbf16, #tpu.memory_space<vmem>>, vector<8x8x128xbf16>
    %45 = vector.shape_cast %44 : vector<8x8x128xbf16> to vector<64x128xbf16>
    %c4 = arith.constant 4 : index
    %c0_54 = arith.constant 0 : index
    %c0_55 = arith.constant 0 : index
    %46 = vector.load %arg4[%c4, %c0_54, %c0_55] : memref<9x128x128xbf16, #tpu.memory_space<vmem>>, vector<1x128x128xbf16>
    %47 = vector.shape_cast %46 : vector<1x128x128xbf16> to vector<128x128xbf16>
    %cst_56 = arith.constant dense<0.000000e+00> : vector<64x128xf32>
    %48 = tpu.matmul %45, %47, %cst_56 {dimension_numbers = #tpu.dot_dimension_numbers<[1], [0], [0], [1], [0, 0, 1, 1], [], []>} : vector<64x128xbf16>, vector<128x128xbf16>, vector<64x128xf32> -> vector<64x128xf32>
    %49 = arith.addf %43, %48 : vector<64x128xf32>
    %c1_57 = arith.constant 1 : index
    %c2_58 = arith.constant 2 : index
    %c0_59 = arith.constant 0 : index
    %50 = vector.load %arg10[%c1_57, %c2_58, %c0_59] : memref<10x10x128xbf16, #tpu.memory_space<vmem>>, vector<8x8x128xbf16>
    %51 = vector.shape_cast %50 : vector<8x8x128xbf16> to vector<64x128xbf16>
    %c5 = arith.constant 5 : index
    %c0_60 = arith.constant 0 : index
    %c0_61 = arith.constant 0 : index
    %52 = vector.load %arg4[%c5, %c0_60, %c0_61] : memref<9x128x128xbf16, #tpu.memory_space<vmem>>, vector<1x128x128xbf16>
    %53 = vector.shape_cast %52 : vector<1x128x128xbf16> to vector<128x128xbf16>
    %cst_62 = arith.constant dense<0.000000e+00> : vector<64x128xf32>
    %54 = tpu.matmul %51, %53, %cst_62 {dimension_numbers = #tpu.dot_dimension_numbers<[1], [0], [0], [1], [0, 0, 1, 1], [], []>} : vector<64x128xbf16>, vector<128x128xbf16>, vector<64x128xf32> -> vector<64x128xf32>
    %55 = arith.addf %49, %54 : vector<64x128xf32>
    %c2_63 = arith.constant 2 : index
    %c0_64 = arith.constant 0 : index
    %c0_65 = arith.constant 0 : index
    %56 = vector.load %arg10[%c2_63, %c0_64, %c0_65] : memref<10x10x128xbf16, #tpu.memory_space<vmem>>, vector<8x8x128xbf16>
    %57 = vector.shape_cast %56 : vector<8x8x128xbf16> to vector<64x128xbf16>
    %c6 = arith.constant 6 : index
    %c0_66 = arith.constant 0 : index
    %c0_67 = arith.constant 0 : index
    %58 = vector.load %arg4[%c6, %c0_66, %c0_67] : memref<9x128x128xbf16, #tpu.memory_space<vmem>>, vector<1x128x128xbf16>
    %59 = vector.shape_cast %58 : vector<1x128x128xbf16> to vector<128x128xbf16>
    %cst_68 = arith.constant dense<0.000000e+00> : vector<64x128xf32>
    %60 = tpu.matmul %57, %59, %cst_68 {dimension_numbers = #tpu.dot_dimension_numbers<[1], [0], [0], [1], [0, 0, 1, 1], [], []>} : vector<64x128xbf16>, vector<128x128xbf16>, vector<64x128xf32> -> vector<64x128xf32>
    %61 = arith.addf %55, %60 : vector<64x128xf32>
    %c2_69 = arith.constant 2 : index
    %c1_70 = arith.constant 1 : index
    %c0_71 = arith.constant 0 : index
    %62 = vector.load %arg10[%c2_69, %c1_70, %c0_71] : memref<10x10x128xbf16, #tpu.memory_space<vmem>>, vector<8x8x128xbf16>
    %63 = vector.shape_cast %62 : vector<8x8x128xbf16> to vector<64x128xbf16>
    %c7 = arith.constant 7 : index
    %c0_72 = arith.constant 0 : index
    %c0_73 = arith.constant 0 : index
    %64 = vector.load %arg4[%c7, %c0_72, %c0_73] : memref<9x128x128xbf16, #tpu.memory_space<vmem>>, vector<1x128x128xbf16>
    %65 = vector.shape_cast %64 : vector<1x128x128xbf16> to vector<128x128xbf16>
    %cst_74 = arith.constant dense<0.000000e+00> : vector<64x128xf32>
    %66 = tpu.matmul %63, %65, %cst_74 {dimension_numbers = #tpu.dot_dimension_numbers<[1], [0], [0], [1], [0, 0, 1, 1], [], []>} : vector<64x128xbf16>, vector<128x128xbf16>, vector<64x128xf32> -> vector<64x128xf32>
    %67 = arith.addf %61, %66 : vector<64x128xf32>
    %c2_75 = arith.constant 2 : index
    %c2_76 = arith.constant 2 : index
    %c0_77 = arith.constant 0 : index
    %68 = vector.load %arg10[%c2_75, %c2_76, %c0_77] : memref<10x10x128xbf16, #tpu.memory_space<vmem>>, vector<8x8x128xbf16>
    %69 = vector.shape_cast %68 : vector<8x8x128xbf16> to vector<64x128xbf16>
    %c8 = arith.constant 8 : index
    %c0_78 = arith.constant 0 : index
    %c0_79 = arith.constant 0 : index
    %70 = vector.load %arg4[%c8, %c0_78, %c0_79] : memref<9x128x128xbf16, #tpu.memory_space<vmem>>, vector<1x128x128xbf16>
    %71 = vector.shape_cast %70 : vector<1x128x128xbf16> to vector<128x128xbf16>
    %cst_80 = arith.constant dense<0.000000e+00> : vector<64x128xf32>
    %72 = tpu.matmul %69, %71, %cst_80 {dimension_numbers = #tpu.dot_dimension_numbers<[1], [0], [0], [1], [0, 0, 1, 1], [], []>} : vector<64x128xbf16>, vector<128x128xbf16>, vector<64x128xf32> -> vector<64x128xf32>
    %73 = arith.addf %67, %72 : vector<64x128xf32>
    %c0_81 = arith.constant 0 : index
    %c0_82 = arith.constant 0 : index
    %74 = vector.load %arg5[%c0_81, %c0_82] : memref<1x128xf32, #tpu.memory_space<vmem>>, vector<1x128xf32>
    %75 = vector.broadcast %74 : vector<1x128xf32> to vector<64x128xf32>
    %76 = arith.addf %73, %75 : vector<64x128xf32>
    %cst_83 = arith.constant 0.000000e+00 : f32
    %77 = vector.broadcast %cst_83 : f32 to vector<64x128xf32>
    %78 = arith.maximumf %76, %77 : vector<64x128xf32>
    %79 = arith.truncf %78 : vector<64x128xf32> to vector<64x128xbf16>
    %c0_84 = arith.constant 0 : index
    %c0_85 = arith.constant 0 : index
    %c0_86 = arith.constant 0 : index
    %c0_87 = arith.constant 0 : index
    %80 = vector.load %arg1[%c0_84, %c0_85, %c0_86, %c0_87] : memref<1x8x8x128xbf16, #tpu.memory_space<vmem>>, vector<1x8x8x128xbf16>
    %81 = vector.shape_cast %80 : vector<1x8x8x128xbf16> to vector<8x8x128xbf16>
    %82 = vector.shape_cast %81 : vector<8x8x128xbf16> to vector<64x128xbf16>
    %c0_88 = arith.constant 0 : index
    %c0_89 = arith.constant 0 : index
    %83 = vector.load %arg6[%c0_88, %c0_89] : memref<128x128xbf16, #tpu.memory_space<vmem>>, vector<128x128xbf16>
    %cst_90 = arith.constant dense<0.000000e+00> : vector<64x128xf32>
    %84 = tpu.matmul %79, %83, %cst_90 {dimension_numbers = #tpu.dot_dimension_numbers<[1], [0], [0], [1], [0, 0, 1, 1], [], []>} : vector<64x128xbf16>, vector<128x128xbf16>, vector<64x128xf32> -> vector<64x128xf32>
    %c0_91 = arith.constant 0 : index
    %c0_92 = arith.constant 0 : index
    %85 = vector.load %arg7[%c0_91, %c0_92] : memref<128x128xbf16, #tpu.memory_space<vmem>>, vector<128x128xbf16>
    %cst_93 = arith.constant dense<0.000000e+00> : vector<64x128xf32>
    %86 = tpu.matmul %82, %85, %cst_93 {dimension_numbers = #tpu.dot_dimension_numbers<[1], [0], [0], [1], [0, 0, 1, 1], [], []>} : vector<64x128xbf16>, vector<128x128xbf16>, vector<64x128xf32> -> vector<64x128xf32>
    %87 = arith.addf %84, %86 : vector<64x128xf32>
    %c0_94 = arith.constant 0 : index
    %c0_95 = arith.constant 0 : index
    %88 = vector.load %arg8[%c0_94, %c0_95] : memref<1x128xf32, #tpu.memory_space<vmem>>, vector<1x128xf32>
    %89 = vector.broadcast %88 : vector<1x128xf32> to vector<64x128xf32>
    %90 = arith.addf %87, %89 : vector<64x128xf32>
    %cst_96 = arith.constant 0.000000e+00 : f32
    %91 = vector.broadcast %cst_96 : f32 to vector<64x128xf32>
    %92 = arith.maximumf %90, %91 : vector<64x128xf32>
    %93 = arith.truncf %92 : vector<64x128xf32> to vector<64x128xbf16>
    %94 = vector.shape_cast %93 : vector<64x128xbf16> to vector<8x8x128xbf16>
    %c0_97 = arith.constant 0 : index
    %c0_98 = arith.constant 0 : index
    %c0_99 = arith.constant 0 : index
    %c0_100 = arith.constant 0 : index
    %95 = vector.load %arg9[%c0_97, %c0_98, %c0_99, %c0_100] : memref<1x8x8x128xbf16, #tpu.memory_space<vmem>>, vector<1x8x8x128xbf16>
    %96 = vector.shape_cast %95 : vector<1x8x8x128xbf16> to vector<8x8x128xbf16>
    %97 = vector.shape_cast %94 : vector<8x8x128xbf16> to vector<1x8x8x128xbf16>
    tpu.vector_store %arg9[%c0_97, %c0_98, %c0_99, %c0_100], %97 {strides = array<i32>} : memref<1x8x8x128xbf16, #tpu.memory_space<vmem>>, vector<1x8x8x128xbf16>,
    return
  }
  func.func @transform_0(%arg0: i32) -> (i32, i32, i32, i32) {
    %c0_i32 = arith.constant 0 : i32
    %c0_i32_0 = arith.constant 0 : i32
    %c0_i32_1 = arith.constant 0 : i32
    %c0_i32_2 = arith.constant 0 : i32
    return %arg0, %c0_i32, %c0_i32_0, %c0_i32_1 : i32, i32, i32, i32
  }
  func.func @transform_1(%arg0: i32) -> (i32, i32) {
    %c0_i32 = arith.constant 0 : i32
    %c0_i32_0 = arith.constant 0 : i32
    %c0_i32_1 = arith.constant 0 : i32
    return %c0_i32, %c0_i32_0 : i32, i32
  }
  func.func @transform_2(%arg0: i32) -> (i32, i32) {
    %c0_i32 = arith.constant 0 : i32
    %c0_i32_0 = arith.constant 0 : i32
    %c0_i32_1 = arith.constant 0 : i32
    return %c0_i32, %c0_i32_0 : i32, i32
  }
  func.func @transform_3(%arg0: i32) -> (i32, i32, i32) {
    %c0_i32 = arith.constant 0 : i32
    %c0_i32_0 = arith.constant 0 : i32
    %c0_i32_1 = arith.constant 0 : i32
    %c0_i32_2 = arith.constant 0 : i32
    return %c0_i32, %c0_i32_0, %c0_i32_1 : i32, i32, i32
  }
  func.func @transform_4(%arg0: i32) -> (i32, i32) {
    %c0_i32 = arith.constant 0 : i32
    %c0_i32_0 = arith.constant 0 : i32
    %c0_i32_1 = arith.constant 0 : i32
    return %c0_i32, %c0_i32_0 : i32, i32
  }
  func.func @transform_5(%arg0: i32) -> (i32, i32) {
    %c0_i32 = arith.constant 0 : i32
    %c0_i32_0 = arith.constant 0 : i32
    %c0_i32_1 = arith.constant 0 : i32
    return %c0_i32, %c0_i32_0 : i32, i32
  }
  func.func @transform_6(%arg0: i32) -> (i32, i32) {
    %c0_i32 = arith.constant 0 : i32
    %c0_i32_0 = arith.constant 0 : i32
    %c0_i32_1 = arith.constant 0 : i32
    return %c0_i32, %c0_i32_0 : i32, i32
  }
  func.func @transform_7(%arg0: i32) -> (i32, i32) {
    %c0_i32 = arith.constant 0 : i32
    %c0_i32_0 = arith.constant 0 : i32
    %c0_i32_1 = arith.constant 0 : i32
    return %c0_i32, %c0_i32_0 : i32, i32
  }
  func.func @transform_8(%arg0: i32) -> (i32, i32, i32, i32) {
    %c0_i32 = arith.constant 0 : i32
    %c0_i32_0 = arith.constant 0 : i32
    %c0_i32_1 = arith.constant 0 : i32
    %c0_i32_2 = arith.constant 0 : i32
    return %arg0, %c0_i32, %c0_i32_0, %c0_i32_1 : i32, i32, i32, i32
  }
}

</mosaic_0001>

<llo_original>
// kernel: tpu_custom_call.1
$region0: #{tpu_custom_call.1}
  #allocation0 [shape = 'u32[]', space=smem, size = 0x4, offset = 0x4, fixed_abs, tag = 'smem constant byte address 0x4 - core index']
  #allocation1 [shape = 'u32[72,128]{1,0:T(1,128)}', space=vmem, size = 0x9000, scoped, tag = 'internal scratch']
  #allocation2 [shape = 'bf16[10,10,128]{2,1,0:T(8,128)(2,1)}', space=vmem, size = 0xa000, scoped, tag = 'scratch operand']
  %s0 = inlined_call_operand.hbm [shape: bf16[2,8,8,128], index: 0, kind: input, shape index: {}]
  %s1 = inlined_call_operand.hbm [shape: bf16[128,128], index: 1, kind: input, shape index: {}]
  %s2 = inlined_call_operand.vmem [shape: f32[1,128], index: 2, kind: input, shape index: {}]
  %s3 = inlined_call_operand.hbm [shape: bf16[9,128,128], index: 3, kind: input, shape index: {}]
  %s4 = inlined_call_operand.vmem [shape: f32[1,128], index: 4, kind: input, shape index: {}]
  %s5 = inlined_call_operand.hbm [shape: bf16[128,128], index: 5, kind: input, shape index: {}]
  %s6 = inlined_call_operand.hbm [shape: bf16[128,128], index: 6, kind: input, shape index: {}]
  %s7 = inlined_call_operand.vmem [shape: f32[1,128], index: 7, kind: input, shape index: {}]
  %s8 = inlined_call_operand.hbm [shape: bf16[2,8,8,128], index: 8, kind: output, shape index: {}]
  %s9 = sld [smem:[#allocation0]]
  $region85: #{tpu_custom_call.1} parent=0
    _
  %s11 = ssub.s32 1, %s9
  %s12 = scalar_select 0, %s11, %s9
  $region1: #{tpu_custom_call.1} parent=0
    #allocation3 [shape = 'u8[32768]{0}', space=vmem, size = 0x8000, scoped, tag = 'input window, operand 0']
    #allocation4 [shape = 's32[2]{0}', space=sflag, size = 0x8, scoped, tag = 'scoped memory for tpu_custom_call.1']
    #allocation5 [shape = 's32[2]{0}', space=sflag, size = 0x8, scoped, tag = 'scoped memory for tpu_custom_call.1']
    #allocation6 [shape = 'u8[32768]{0}', space=vmem, size = 0x8000, scoped, tag = 'input window, operand 1, single buffered']
    #allocation7 [shape = 's32[1]{0}', space=sflag, size = 0x4, scoped, tag = 'scoped memory for tpu_custom_call.1']
    #allocation8 [shape = 'u8[294912]{0}', space=vmem, size = 0x48000, scoped, tag = 'input window, operand 3, single buffered']
    #allocation9 [shape = 'u8[32768]{0}', space=vmem, size = 0x8000, scoped, tag = 'input window, operand 5, single buffered']
    #allocation10 [shape = 's32[1]{0}', space=sflag, size = 0x4, scoped, tag = 'scoped memory for tpu_custom_call.1']
    #allocation11 [shape = 'u8[32768]{0}', space=vmem, size = 0x8000, scoped, tag = 'input window, operand 6, single buffered']
    #allocation12 [shape = 'u8[32768]{0}', space=vmem, size = 0x8000, scoped, tag = 'output window, operand 0']
    %13 = vsyncpa [#allocation4], 0
    %s14 = scalar_lea.sflag [#allocation4], 1
    %15 = vsyncpa %s14, 0
    %16 = vsyncpa [#allocation7], 0
    %17 = vsyncpa [#allocation10], 0
    %18 = vsyncpa [#allocation5], 0
    %s19 = scalar_lea.sflag [#allocation5], 1
    %20 = vsyncpa %s19, 0
    loop: start=0, step=1, limit=4
    $region2: #{tpu_custom_call.1} parent=1 // loop_pre_header
      _
    $region3: #{tpu_custom_call.1} parent=1 // loop_header
      %s22 = sphi 0, %s26
      %p23 = scmp.ge.s32.totalorder %s22, 4
      %s32 = sphi 0, %s34
      %s35 = sphi 0, %s32
      %s36 = sphi 0, %s35
      %s52 = sphi 0, %s36
      %s56 = sphi 0, %s56
      %s58 = sphi 0, %s56
      %s59 = sphi 0, %s58
      %s73 = sphi 0, %s59
      %s77 = sphi 0, %s77
      %s79 = sphi 0, %s77
      %s80 = sphi 0, %s79
      %s94 = sphi 0, %s80
      %s98 = sphi 0, %s98
      %s100 = sphi 0, %s98
      %s101 = sphi 0, %s100
      %s115 = sphi 0, %s101
      %s119 = sphi 0, %s119
      %s121 = sphi 0, %s119
      %s122 = sphi 0, %s121
      %s136 = sphi 0, %s122
      %s140 = sphi 0, %s140
      %s142 = sphi 0, %s140
      %s143 = sphi 0, %s142
      %s157 = sphi 0, %s143
      %s161 = sphi 0, %s161
      %s163 = sphi 0, %s161
      %s164 = sphi 0, %s163
      %s178 = sphi 0, %s164
      %s182 = sphi 0, %s182
      %s184 = sphi 0, %s182
      %s185 = sphi 0, %s184
      %s199 = sphi 0, %s185
      %s205 = sphi 0, %s207
      %s208 = sphi 0, %s205
      %s209 = sphi 0, %s208
      %s225 = sphi 0, %s209
    $region4: #{tpu_custom_call.1} parent=1 // loop_header_branch
      %25 = sbr.rel (%p23) target = $region8
    $region5: #{tpu_custom_call.1} parent=1 // loop_body
      %s27 = ssub.s32 %s22, 1
      %s28 = ssub.s32 %s22, 2
      %s29 = sadd.s32 %s22, 1
      %s30 = ssub.s32 %s22, %s29
      %p31 = scmp.eq.s32.totalorder %s30, 0
      %s33 = sadd.s32 %s32, 1
      %s34 = scalar_select %p31, %s32, %s33
      %p37 = pneg %p31
      %p38 = scmp.eq.s32.totalorder %s22, 1
      %p39 = por %p37, %p38
      %p40 = scmp.ne.s32.totalorder %s32, %s35
      %p41 = scmp.eq.s32.totalorder %s22, 0
      %p42 = por %p40, %p41
      %p43 = scmp.ne.s32.totalorder %s32, %s35
      %p44 = scmp.eq.s32.totalorder %s27, 1
      %p45 = por %p43, %p44
      %p46 = scmp.ne.s32.totalorder %s35, %s36
      %p47 = scmp.eq.s32.totalorder %s27, 0
      %p48 = por %p46, %p47
      %p49 = scmp.ne.s32.totalorder %s35, %s36
      %p50 = scmp.eq.s32.totalorder %s28, 1
      %p51 = por %p49, %p50
      %p53 = scmp.ne.s32.totalorder %s36, %s52
      %p54 = scmp.eq.s32.totalorder %s28, 0
      %p55 = por %p53, %p54
      %s57 = sadd.s32 %s56, 1
      %p60 = scmp.eq.s32.totalorder %s22, 1
      %p61 = scmp.ne.s32.totalorder %s56, %s58
      %p62 = scmp.eq.s32.totalorder %s22, 0
      %p63 = por %p61, %p62
      %p64 = scmp.ne.s32.totalorder %s56, %s58
      %p65 = scmp.eq.s32.totalorder %s27, 1
      %p66 = por %p64, %p65
      %p67 = scmp.ne.s32.totalorder %s58, %s59
      %p68 = scmp.eq.s32.totalorder %s27, 0
      %p69 = por %p67, %p68
      %p70 = scmp.ne.s32.totalorder %s58, %s59
      %p71 = scmp.eq.s32.totalorder %s28, 1
      %p72 = por %p70, %p71
      %p74 = scmp.ne.s32.totalorder %s59, %s73
      %p75 = scmp.eq.s32.totalorder %s28, 0
      %p76 = por %p74, %p75
      %s78 = sadd.s32 %s77, 1
      %p81 = scmp.eq.s32.totalorder %s22, 1
      %p82 = scmp.ne.s32.totalorder %s77, %s79
      %p83 = scmp.eq.s32.totalorder %s22, 0
      %p84 = por %p82, %p83
      %p85 = scmp.ne.s32.totalorder %s77, %s79
      %p86 = scmp.eq.s32.totalorder %s27, 1
      %p87 = por %p85, %p86
      %p88 = scmp.ne.s32.totalorder %s79, %s80
      %p89 = scmp.eq.s32.totalorder %s27, 0
      %p90 = por %p88, %p89
      %p91 = scmp.ne.s32.totalorder %s79, %s80
      %p92 = scmp.eq.s32.totalorder %s28, 1
      %p93 = por %p91, %p92
      %p95 = scmp.ne.s32.totalorder %s80, %s94
      %p96 = scmp.eq.s32.totalorder %s28, 0
      %p97 = por %p95, %p96
      %s99 = sadd.s32 %s98, 1
      %p102 = scmp.eq.s32.totalorder %s22, 1
      %p103 = scmp.ne.s32.totalorder %s98, %s100
      %p104 = scmp.eq.s32.totalorder %s22, 0
      %p105 = por %p103, %p104
      %p106 = scmp.ne.s32.totalorder %s98, %s100
      %p107 = scmp.eq.s32.totalorder %s27, 1
      %p108 = por %p106, %p107
      %p109 = scmp.ne.s32.totalorder %s100, %s101
      %p110 = scmp.eq.s32.totalorder %s27, 0
      %p111 = por %p109, %p110
      %p112 = scmp.ne.s32.totalorder %s100, %s101
      %p113 = scmp.eq.s32.totalorder %s28, 1
      %p114 = por %p112, %p113
      %p116 = scmp.ne.s32.totalorder %s101, %s115
      %p117 = scmp.eq.s32.totalorder %s28, 0
      %p118 = por %p116, %p117
      %s120 = sadd.s32 %s119, 1
      %p123 = scmp.eq.s32.totalorder %s22, 1
      %p124 = scmp.ne.s32.totalorder %s119, %s121
      %p125 = scmp.eq.s32.totalorder %s22, 0
      %p126 = por %p124, %p125
      %p127 = scmp.ne.s32.totalorder %s119, %s121
      %p128 = scmp.eq.s32.totalorder %s27, 1
      %p129 = por %p127, %p128
      %p130 = scmp.ne.s32.totalorder %s121, %s122
      %p131 = scmp.eq.s32.totalorder %s27, 0
      %p132 = por %p130, %p131
      %p133 = scmp.ne.s32.totalorder %s121, %s122
      %p134 = scmp.eq.s32.totalorder %s28, 1
      %p135 = por %p133, %p134
      %p137 = scmp.ne.s32.totalorder %s122, %s136
      %p138 = scmp.eq.s32.totalorder %s28, 0
      %p139 = por %p137, %p138
      %s141 = sadd.s32 %s140, 1
      %p144 = scmp.eq.s32.totalorder %s22, 1
      %p145 = scmp.ne.s32.totalorder %s140, %s142
      %p146 = scmp.eq.s32.totalorder %s22, 0
      %p147 = por %p145, %p146
      %p148 = scmp.ne.s32.totalorder %s140, %s142
      %p149 = scmp.eq.s32.totalorder %s27, 1
      %p150 = por %p148, %p149
      %p151 = scmp.ne.s32.totalorder %s142, %s143
      %p152 = scmp.eq.s32.totalorder %s27, 0
      %p153 = por %p151, %p152
      %p154 = scmp.ne.s32.totalorder %s142, %s143
      %p155 = scmp.eq.s32.totalorder %s28, 1
      %p156 = por %p154, %p155
      %p158 = scmp.ne.s32.totalorder %s143, %s157
      %p159 = scmp.eq.s32.totalorder %s28, 0
      %p160 = por %p158, %p159
      %s162 = sadd.s32 %s161, 1
      %p165 = scmp.eq.s32.totalorder %s22, 1
      %p166 = scmp.ne.s32.totalorder %s161, %s163
      %p167 = scmp.eq.s32.totalorder %s22, 0
      %p168 = por %p166, %p167
      %p169 = scmp.ne.s32.totalorder %s161, %s163
      %p170 = scmp.eq.s32.totalorder %s27, 1
      %p171 = por %p169, %p170
      %p172 = scmp.ne.s32.totalorder %s163, %s164
      %p173 = scmp.eq.s32.totalorder %s27, 0
      %p174 = por %p172, %p173
      %p175 = scmp.ne.s32.totalorder %s163, %s164
      %p176 = scmp.eq.s32.totalorder %s28, 1
      %p177 = por %p175, %p176
      %p179 = scmp.ne.s32.totalorder %s164, %s178
      %p180 = scmp.eq.s32.totalorder %s28, 0
      %p181 = por %p179, %p180
      %s183 = sadd.s32 %s182, 1
      %p186 = scmp.eq.s32.totalorder %s22, 1
      %p187 = scmp.ne.s32.totalorder %s182, %s184
      %p188 = scmp.eq.s32.totalorder %s22, 0
      %p189 = por %p187, %p188
      %p190 = scmp.ne.s32.totalorder %s182, %s184
      %p191 = scmp.eq.s32.totalorder %s27, 1
      %p192 = por %p190, %p191
      %p193 = scmp.ne.s32.totalorder %s184, %s185
      %p194 = scmp.eq.s32.totalorder %s27, 0
      %p195 = por %p193, %p194
      %p196 = scmp.ne.s32.totalorder %s184, %s185
      %p197 = scmp.eq.s32.totalorder %s28, 1
      %p198 = por %p196, %p197
      %p200 = scmp.ne.s32.totalorder %s185, %s199
      %p201 = scmp.eq.s32.totalorder %s28, 0
      %p202 = por %p200, %p201
      %s203 = ssub.s32 %s22, %s29
      %p204 = scmp.eq.s32.totalorder %s203, 0
      %s206 = sadd.s32 %s205, 1
      %s207 = scalar_select %p204, %s205, %s206
      %p210 = pneg %p204
      %p211 = scmp.eq.s32.totalorder %s22, 1
      %p212 = por %p210, %p211
      %p213 = scmp.ne.s32.totalorder %s205, %s208
      %p214 = scmp.eq.s32.totalorder %s22, 0
      %p215 = por %p213, %p214
      %p216 = scmp.ne.s32.totalorder %s205, %s208
      %p217 = scmp.eq.s32.totalorder %s27, 1
      %p218 = por %p216, %p217
      %p219 = scmp.ne.s32.totalorder %s208, %s209
      %p220 = scmp.eq.s32.totalorder %s27, 0
      %p221 = por %p219, %p220
      %p222 = scmp.ne.s32.totalorder %s208, %s209
      %p223 = scmp.eq.s32.totalorder %s28, 1
      %p224 = por %p222, %p223
      %p226 = scmp.ne.s32.totalorder %s209, %s225
      %p227 = scmp.eq.s32.totalorder %s28, 0
      %p228 = por %p226, %p227
      %p229 = scmp.le.s32.totalorder 1, %s22
      %p230 = scmp.lt.s32.totalorder %s22, 3
      %p231 = pnand %p229, %p230
      %p232 = pneg %p231
      // Predicated region
      $region9: #{tpu_custom_call.1} parent=5 // pred_check
        _
      $region10: #{tpu_custom_call.1} parent=5 // pred_check_branch
        %234 = sbr.rel (%p231) target = $region12
      $region11: #{tpu_custom_call.1} parent=5 // pred_region
        %s235 = ssub.s32 %s22, 1
        // Predicated region
        $region13: #{tpu_custom_call.1} parent=11 // pred_check
          %p236 = pneg %p69
        $region14: #{tpu_custom_call.1} parent=11 // pred_check_branch
          %238 = sbr.rel (%p236) target = $region16
        $region15: #{tpu_custom_call.1} parent=11 // pred_region
          %240 = vsyncadd [#allocation7], 0
          %s241 = sshll.u32 %s1, 4
          %s242 = int_to_ptr.hbm [resolvable:$true] %s241
          %s243 = sshll.u32 [#allocation6], 4
          %s244 = int_to_ptr.vmem [resolvable:$true] %s243
          %249 = dma.hbm_to_vmem [thread:$0]  %s242, 1024, %s244, [#allocation7], 64, 64, 4
        $region16: #{tpu_custom_call.1} parent=11 // pred_fallthru
          _
        // Predicated region
        $region17: #{tpu_custom_call.1} parent=11 // pred_check
          %p250 = pneg %p90
        $region18: #{tpu_custom_call.1} parent=11 // pred_check_branch
          %252 = sbr.rel (%p250) target = $region20
        $region19: #{tpu_custom_call.1} parent=11 // pred_region
          _
        $region20: #{tpu_custom_call.1} parent=11 // pred_fallthru
          _
        // Predicated region
        $region21: #{tpu_custom_call.1} parent=11 // pred_check
          %p253 = pneg %p111
        $region22: #{tpu_custom_call.1} parent=11 // pred_check_branch
          %255 = sbr.rel (%p253) target = $region24
        $region23: #{tpu_custom_call.1} parent=11 // pred_region
          %257 = vsyncadd [#allocation7], 0
          %s258 = sshll.u32 %s3, 4
          %s259 = int_to_ptr.hbm [resolvable:$true] %s258
          %s260 = sshll.u32 [#allocation8], 4
          %s261 = int_to_ptr.vmem [resolvable:$true] %s260
          %266 = dma.hbm_to_vmem [thread:$0]  %s259, 9216, %s261, [#allocation7], 64, 64, 4
        $region24: #{tpu_custom_call.1} parent=11 // pred_fallthru
          _
        // Predicated region
        $region25: #{tpu_custom_call.1} parent=11 // pred_check
          %p267 = pneg %p132
        $region26: #{tpu_custom_call.1} parent=11 // pred_check_branch
          %269 = sbr.rel (%p267) target = $region28
        $region27: #{tpu_custom_call.1} parent=11 // pred_region
          _
        $region28: #{tpu_custom_call.1} parent=11 // pred_fallthru
          _
        // Predicated region
        $region29: #{tpu_custom_call.1} parent=11 // pred_check
          %p270 = pneg %p153
        $region30: #{tpu_custom_call.1} parent=11 // pred_check_branch
          %272 = sbr.rel (%p270) target = $region32
        $region31: #{tpu_custom_call.1} parent=11 // pred_region
          %274 = vsyncadd [#allocation10], 0
          %s275 = sshll.u32 %s5, 4
          %s276 = int_to_ptr.hbm [resolvable:$true] %s275
          %s277 = sshll.u32 [#allocation9], 4
          %s278 = int_to_ptr.vmem [resolvable:$true] %s277
          %283 = dma.hbm_to_vmem [thread:$0]  %s276, 1024, %s278, [#allocation10], 64, 64, 4
        $region32: #{tpu_custom_call.1} parent=11 // pred_fallthru
          _
        // Predicated region
        $region33: #{tpu_custom_call.1} parent=11 // pred_check
          %p284 = pneg %p174
        $region34: #{tpu_custom_call.1} parent=11 // pred_check_branch
          %286 = sbr.rel (%p284) target = $region36
        $region35: #{tpu_custom_call.1} parent=11 // pred_region
          %288 = vsyncadd [#allocation10], 0
          %s289 = sshll.u32 %s6, 4
          %s290 = int_to_ptr.hbm [resolvable:$true] %s289
          %s291 = sshll.u32 [#allocation11], 4
          %s292 = int_to_ptr.vmem [resolvable:$true] %s291
          %297 = dma.hbm_to_vmem [thread:$0]  %s290, 1024, %s292, [#allocation10], 64, 64, 4
        $region36: #{tpu_custom_call.1} parent=11 // pred_fallthru
          _
        // Predicated region
        $region37: #{tpu_custom_call.1} parent=11 // pred_check
          %p298 = pneg %p195
        $region38: #{tpu_custom_call.1} parent=11 // pred_check_branch
          %300 = sbr.rel (%p298) target = $region40
        $region39: #{tpu_custom_call.1} parent=11 // pred_region
          _
        $region40: #{tpu_custom_call.1} parent=11 // pred_fallthru
          _
      $region12: #{tpu_custom_call.1} parent=5 // pred_fallthru
        _
      %p301 = scmp.lt.s32.totalorder %s22, 2
      // Predicated region
      $region41: #{tpu_custom_call.1} parent=5 // pred_check
        %p302 = pneg %p301
      $region42: #{tpu_custom_call.1} parent=5 // pred_check_branch
        %304 = sbr.rel (%p302) target = $region44
      $region43: #{tpu_custom_call.1} parent=5 // pred_region
        // Predicated region
        $region45: #{tpu_custom_call.1} parent=43 // pred_check
          %p305 = pneg %p42
        $region46: #{tpu_custom_call.1} parent=43 // pred_check_branch
          %307 = sbr.rel (%p305) target = $region48
        $region47: #{tpu_custom_call.1} parent=43 // pred_region
          %s308 = sand.u32 %s32, 1
          %s309 = scalar_lea.sflag [#allocation4], %s308
          %s310 = sand.u32 %s32, 1
          %s311 = smul.addr %s310, 32
          %s312 = scalar_lea.vmem [#allocation3], %s311
          %314 = vsyncadd %s309, 0
          %s315 = smul.addr %s22, 8
          %s316 = smul.addr %s315, 4
          %s317 = scalar_lea.hbm %s0, %s316
          %s318 = sshll.u32 %s317, 4
          %s319 = int_to_ptr.hbm [resolvable:$true] %s318
          %s320 = sshll.u32 %s312, 4
          %s321 = int_to_ptr.vmem [resolvable:$true] %s320
          %326 = dma.hbm_to_vmem [thread:$0]  %s319, 512, %s321, %s309, 64, 64, 4
        $region48: #{tpu_custom_call.1} parent=43 // pred_fallthru
          _
      $region44: #{tpu_custom_call.1} parent=5 // pred_fallthru
        _
      %p327 = scmp.le.s32.totalorder 1, %s22
      %p328 = scmp.lt.s32.totalorder %s22, 3
      %p329 = pnand %p327, %p328
      %p330 = pneg %p329
      // Predicated region
      $region49: #{tpu_custom_call.1} parent=5 // pred_check
        _
      $region50: #{tpu_custom_call.1} parent=5 // pred_check_branch
        %332 = sbr.rel (%p329) target = $region52
      $region51: #{tpu_custom_call.1} parent=5 // pred_region
        %s333 = ssub.s32 %s22, 1
        %s334 = sand.u32 %s35, 1
        %s335 = scalar_lea.sflag [#allocation4], %s334
        %s336 = sand.u32 %s35, 1
        %s337 = smul.addr %s336, 32
        %s338 = scalar_lea.vmem [#allocation3], %s337
        // Predicated region
        $region53: #{tpu_custom_call.1} parent=51 // pred_check
          %p339 = pneg %p48
        $region54: #{tpu_custom_call.1} parent=51 // pred_check_branch
          %341 = sbr.rel (%p339) target = $region56
        $region55: #{tpu_custom_call.1} parent=51 // pred_region
          %343 = dma.done %s335, 512
        $region56: #{tpu_custom_call.1} parent=51 // pred_fallthru
          _
        // Predicated region
        $region57: #{tpu_custom_call.1} parent=51 // pred_check
          %p344 = pneg %p69
        $region58: #{tpu_custom_call.1} parent=51 // pred_check_branch
          %346 = sbr.rel (%p344) target = $region60
        $region59: #{tpu_custom_call.1} parent=51 // pred_region
          %348 = dma.done [#allocation7], 1024
        $region60: #{tpu_custom_call.1} parent=51 // pred_fallthru
          _
        // Predicated region
        $region61: #{tpu_custom_call.1} parent=51 // pred_check
          %p349 = pneg %p111
        $region62: #{tpu_custom_call.1} parent=51 // pred_check_branch
          %351 = sbr.rel (%p349) target = $region64
        $region63: #{tpu_custom_call.1} parent=51 // pred_region
          %353 = dma.done [#allocation7], 9216
        $region64: #{tpu_custom_call.1} parent=51 // pred_fallthru
          _
        // Predicated region
        $region65: #{tpu_custom_call.1} parent=51 // pred_check
          %p354 = pneg %p153
        $region66: #{tpu_custom_call.1} parent=51 // pred_check_branch
          %356 = sbr.rel (%p354) target = $region68
        $region67: #{tpu_custom_call.1} parent=51 // pred_region
          %358 = dma.done [#allocation10], 1024
        $region68: #{tpu_custom_call.1} parent=51 // pred_fallthru
          _
        // Predicated region
        $region69: #{tpu_custom_call.1} parent=51 // pred_check
          %p359 = pneg %p174
        $region70: #{tpu_custom_call.1} parent=51 // pred_check_branch
          %361 = sbr.rel (%p359) target = $region72
        $region71: #{tpu_custom_call.1} parent=51 // pred_region
          %363 = dma.done [#allocation10], 1024
        $region72: #{tpu_custom_call.1} parent=51 // pred_fallthru
          _
        %s364 = sand.u32 %s35, 1
        %s365 = scalar_lea.sflag [#allocation4], %s364
        %s366 = sand.u32 %s35, 1
        %s367 = smul.addr %s366, 32
        %s368 = scalar_lea.vmem [#allocation3], %s367
        %p369 = pneg %p48
        %p370 = pneg %p45
        %p371 = pneg %p69
        %p372 = pneg %p66
        %p373 = pneg %p90
        %p374 = pneg %p87
        %p375 = pneg %p111
        %p376 = pneg %p108
        %p377 = pneg %p132
        %p378 = pneg %p129
        %p379 = pneg %p153
        %p380 = pneg %p150
        %p381 = pneg %p174
        %p382 = pneg %p171
        %p383 = pneg %p195
        %p384 = pneg %p192
        %p385 = pneg %p221
        %p386 = pneg %p218
        %s387 = sand.u32 %s208, 1
        %s388 = scalar_lea.sflag [#allocation5], %s387
        %s389 = sand.u32 %s208, 1
        %s390 = smul.addr %s389, 32
        %s391 = scalar_lea.vmem [#allocation12], %s390
        %393 = vst [vmem:[#allocation2] sm:$0xf] 0
        %394 = vst [vmem:[#allocation2 + $0x4] sm:$0x1] 0
        %s395 = scalar_lea.vmem [#allocation2], 72
        %396 = vst [vmem:[%s395] sm:$0xf] 0
        %397 = vst [vmem:[%s395 + $0x4] sm:$0x1] 0
        %s398 = scalar_lea.vmem [#allocation2], 8
        %vm399 = vcmask 1040384
        %vm400 = vsmask.f32 256
        %vm401 = vmand %vm399, %vm400
        %v402 = vld [vmem:[%s398] sm:$0x1]
        %v403 = vsel %vm401, 0, %v402
        %404 = vst [vmem:[%s398] sm:$0x1] %v403
        %v405 = vld [vmem:[%s398 + $0x8] sm:$0x1]
        %v406 = vsel %vm401, 0, %v405
        %407 = vst [vmem:[%s398 + $0x8] sm:$0x1] %v406
        %v408 = vld [vmem:[%s398 + $0x10] sm:$0x1]
        %v409 = vsel %vm401, 0, %v408
        %410 = vst [vmem:[%s398 + $0x10] sm:$0x1] %v409
        %v411 = vld [vmem:[%s398 + $0x18] sm:$0x1]
        %v412 = vsel %vm401, 0, %v411
        %413 = vst [vmem:[%s398 + $0x18] sm:$0x1] %v412
        %v414 = vld [vmem:[%s398 + $0x20] sm:$0x1]
        %v415 = vsel %vm401, 0, %v414
        %416 = vst [vmem:[%s398 + $0x20] sm:$0x1] %v415
        %v417 = vld [vmem:[%s398 + $0x28] sm:$0x1]
        %v418 = vsel %vm401, 0, %v417
        %419 = vst [vmem:[%s398 + $0x28] sm:$0x1] %v418
        %v420 = vld [vmem:[%s398 + $0x30] sm:$0x1]
        %v421 = vsel %vm401, 0, %v420
        %422 = vst [vmem:[%s398 + $0x30] sm:$0x1] %v421
        %v423 = vld [vmem:[%s398 + $0x38] sm:$0x1]
        %v424 = vsel %vm401, 0, %v423
        %425 = vst [vmem:[%s398 + $0x38] sm:$0x1] %v424
        %vm426 = vsmask.f32 7938
        %vm427 = vmand %vm399, %vm426
        %v428 = vld [vmem:[%s398 + $0x4] sm:$0x1]
        %v429 = vsel %vm427, 0, %v428
        %430 = vst [vmem:[%s398 + $0x4] sm:$0x1] %v429
        %v431 = vld [vmem:[%s398 + $0xc] sm:$0x1]
        %v432 = vsel %vm427, 0, %v431
        %433 = vst [vmem:[%s398 + $0xc] sm:$0x1] %v432
        %v434 = vld [vmem:[%s398 + $0x14] sm:$0x1]
        %v435 = vsel %vm427, 0, %v434
        %436 = vst [vmem:[%s398 + $0x14] sm:$0x1] %v435
        %v437 = vld [vmem:[%s398 + $0x1c] sm:$0x1]
        %v438 = vsel %vm427, 0, %v437
        %439 = vst [vmem:[%s398 + $0x1c] sm:$0x1] %v438
        %v440 = vld [vmem:[%s398 + $0x24] sm:$0x1]
        %v441 = vsel %vm427, 0, %v440
        %442 = vst [vmem:[%s398 + $0x24] sm:$0x1] %v441
        %v443 = vld [vmem:[%s398 + $0x2c] sm:$0x1]
        %v444 = vsel %vm427, 0, %v443
        %445 = vst [vmem:[%s398 + $0x2c] sm:$0x1] %v444
        %v446 = vld [vmem:[%s398 + $0x34] sm:$0x1]
        %v447 = vsel %vm427, 0, %v446
        %448 = vst [vmem:[%s398 + $0x34] sm:$0x1] %v447
        %v449 = vld [vmem:[%s398 + $0x3c] sm:$0x1]
        %v450 = vsel %vm427, 0, %v449
        %451 = vst [vmem:[%s398 + $0x3c] sm:$0x1] %v450
        %v452 = vld [vmem:[%s338] sm:$0xf]
        %v453 = vld [vmem:[%s338 + $0x4] sm:$0xf]
        %v454 = vld [vmem:[%s338 + $0x8] sm:$0xf]
        %v455 = vld [vmem:[%s338 + $0xc] sm:$0xf]
        %v456 = vld [vmem:[%s338 + $0x10] sm:$0xf]
        %v457 = vld [vmem:[%s338 + $0x14] sm:$0xf]
        %v458 = vld [vmem:[%s338 + $0x18] sm:$0xf]
        %v459 = vld [vmem:[%s338 + $0x1c] sm:$0xf]
        %v460 = vld [vmem:[#allocation6] sm:$0xf]
        %v461 = vld [vmem:[#allocation6 + $0x4] sm:$0xf]
        %v462 = vld [vmem:[#allocation6 + $0x8] sm:$0xf]
        %v463 = vld [vmem:[#allocation6 + $0xc] sm:$0xf]
        %v464 = vld [vmem:[#allocation6 + $0x10] sm:$0xf]
        %v465 = vld [vmem:[#allocation6 + $0x14] sm:$0xf]
        %v466 = vld [vmem:[#allocation6 + $0x18] sm:$0xf]
        %v467 = vld [vmem:[#allocation6 + $0x1c] sm:$0xf]
        %v468 = vld [vmem:[#allocation6 + $0x20] sm:$0xf]
        %v469 = vld [vmem:[#allocation6 + $0x24] sm:$0xf]
        %v470 = vld [vmem:[#allocation6 + $0x28] sm:$0xf]
        %v471 = vld [vmem:[#allocation6 + $0x2c] sm:$0xf]
        %v472 = vld [vmem:[#allocation6 + $0x30] sm:$0xf]
        %v473 = vld [vmem:[#allocation6 + $0x34] sm:$0xf]
        %v474 = vld [vmem:[#allocation6 + $0x38] sm:$0xf]
        %v475 = vld [vmem:[#allocation6 + $0x3c] sm:$0xf]
        %v476 = vld [vmem:[%s2] sm:$0x1]
        %v478 = vperm.slane %v476, 0
        %v488 = vunpack.c.l.b16 %v452
        %v489 = vunpack.c.l.b16 %v453
        %v490 = vunpack.c.l.b16 %v454
        %v491 = vunpack.c.l.b16 %v455
        %v492 = vunpack.c.l.b16 %v456
        %v493 = vunpack.c.l.b16 %v457
        %v494 = vunpack.c.l.b16 %v458
        %v495 = vunpack.c.l.b16 %v459
        %v496 = vpack.c.b16 %v489, %v488
        %v497 = vpack.c.b16 %v491, %v490
        %v498 = vpack.c.b16 %v493, %v492
        %v499 = vpack.c.b16 %v495, %v494
        %v520 = vunpack.c.l.b16 %v460
        %v521 = vunpack.c.l.b16 %v461
        %v522 = vunpack.c.l.b16 %v462
        %v523 = vunpack.c.l.b16 %v463
        %v524 = vunpack.c.l.b16 %v464
        %v525 = vunpack.c.l.b16 %v465
        %v526 = vunpack.c.l.b16 %v466
        %v527 = vunpack.c.l.b16 %v467
        %v528 = vunpack.c.l.b16 %v468
        %v529 = vunpack.c.l.b16 %v469
        %v530 = vunpack.c.l.b16 %v470
        %v531 = vunpack.c.l.b16 %v471
        %v532 = vunpack.c.l.b16 %v472
        %v533 = vunpack.c.l.b16 %v473
        %v534 = vunpack.c.l.b16 %v474
        %v535 = vunpack.c.l.b16 %v475
        %v536 = vpack.c.b16 %v521, %v520
        %v537 = vpack.c.b16 %v523, %v522
        %v538 = vpack.c.b16 %v525, %v524
        %v539 = vpack.c.b16 %v527, %v526
        %v540 = vpack.c.b16 %v529, %v528
        %v541 = vpack.c.b16 %v531, %v530
        %v542 = vpack.c.b16 %v533, %v532
        %v543 = vpack.c.b16 %v535, %v534
        %552 = vmatpush.bf16.msra.mxu0 %v543
        %553 = vmatpush.bf16.msra.mxu0 %v542
        %554 = vmatpush.bf16.msra.mxu0 %v541
        %555 = vmatpush.bf16.msra.mxu0 %v540
        %556 = vmatpush.bf16.msra.mxu0 %v539
        %557 = vmatpush.bf16.msra.mxu0 %v538
        %558 = vmatpush.bf16.msra.mxu0 %v537
        %559 = vmatpush.bf16.msra.mxu0 %v536
        %560 = vmatmul.bf16.gmra.mxu0 %v496
        %v561 = vpop.f32.mrf.mxu0
        %v562 = vadd.f32 %v478, %v561
        %v563 = vpop.f32.mrf.mxu0
        %v564 = vadd.f32 %v478, %v563
        %565 = vmatmul.bf16.gmra.mxu0 %v497
        %v566 = vpop.f32.mrf.mxu0
        %v567 = vadd.f32 %v478, %v566
        %v568 = vpop.f32.mrf.mxu0
        %v569 = vadd.f32 %v478, %v568
        %570 = vmatmul.bf16.gmra.mxu0 %v498
        %v571 = vpop.f32.mrf.mxu0
        %v572 = vadd.f32 %v478, %v571
        %v573 = vpop.f32.mrf.mxu0
        %v574 = vadd.f32 %v478, %v573
        %575 = vmatmul.bf16.gmra.mxu0 %v499
        %v576 = vpop.f32.mrf.mxu0
        %v577 = vadd.f32 %v478, %v576
        %v578 = vpop.f32.mrf.mxu0
        %v579 = vadd.f32 %v478, %v578
        %580 = vdwg.mxu0
        %v581 = vmax.f32 %v562, 0.0
        %v582 = vmax.f32 %v564, 0.0
        %v583 = vmax.f32 %v567, 0.0
        %v584 = vmax.f32 %v569, 0.0
        %v585 = vmax.f32 %v572, 0.0
        %v586 = vmax.f32 %v574, 0.0
        %v587 = vmax.f32 %v577, 0.0
        %v588 = vmax.f32 %v579, 0.0
        %v589 = vpack.c.bf16 %v581, %v581
        %v590 = vpack.c.bf16 %v582, %v582
        %v591 = vpack.c.bf16 %v583, %v583
        %v592 = vpack.c.bf16 %v584, %v584
        %v593 = vpack.c.bf16 %v585, %v585
        %v594 = vpack.c.bf16 %v586, %v586
        %v595 = vpack.c.bf16 %v587, %v587
        %v596 = vpack.c.bf16 %v588, %v588
        %v598 = vshrl.u32 %v589, 16
        %v600 = vrot.slane %v598, 7
        %v601 = vshll.u32 %v589, 16
        %v603 = vor.u32 %v600, %v601
        %v604 = vrot.slane %v600, 4
        %v606 = vshrl.u32 %v590, 16
        %v608 = vrot.slane %v606, 7
        %v609 = vshll.u32 %v590, 16
        %v611 = vor.u32 %v608, %v609
        %v612 = vrot.slane %v608, 4
        %v614 = vshrl.u32 %v591, 16
        %v616 = vrot.slane %v614, 7
        %v617 = vshll.u32 %v591, 16
        %v619 = vor.u32 %v616, %v617
        %v620 = vrot.slane %v616, 4
        %v622 = vshrl.u32 %v592, 16
        %v624 = vrot.slane %v622, 7
        %v625 = vshll.u32 %v592, 16
        %v627 = vor.u32 %v624, %v625
        %v628 = vrot.slane %v624, 4
        %v630 = vshrl.u32 %v593, 16
        %v632 = vrot.slane %v630, 7
        %v633 = vshll.u32 %v593, 16
        %v635 = vor.u32 %v632, %v633
        %v636 = vrot.slane %v632, 4
        %v638 = vshrl.u32 %v594, 16
        %v640 = vrot.slane %v638, 7
        %v641 = vshll.u32 %v594, 16
        %v643 = vor.u32 %v640, %v641
        %v644 = vrot.slane %v640, 4
        %v646 = vshrl.u32 %v595, 16
        %v648 = vrot.slane %v646, 7
        %v649 = vshll.u32 %v595, 16
        %v651 = vor.u32 %v648, %v649
        %v652 = vrot.slane %v648, 4
        %v654 = vshrl.u32 %v596, 16
        %v656 = vrot.slane %v654, 7
        %v657 = vshll.u32 %v596, 16
        %v659 = vor.u32 %v656, %v657
        %v660 = vrot.slane %v656, 4
        %vm677 = vcmask 1043456
        %vm678 = vmand %vm677, %vm426
        %v679 = vld [vmem:[%s398] sm:$0xf]
        %v680 = vsel %vm678, %v603, %v679
        %681 = vst [vmem:[%s398] sm:$0xf] %v680
        %v682 = vld [vmem:[%s398 + $0x4] sm:$0x1]
        %v683 = vsel %vm401, %v604, %v682
        %684 = vst [vmem:[%s398 + $0x4] sm:$0x1] %v683
        %v685 = vld [vmem:[%s398 + $0x8] sm:$0xf]
        %v686 = vsel %vm678, %v611, %v685
        %687 = vst [vmem:[%s398 + $0x8] sm:$0xf] %v686
        %v688 = vld [vmem:[%s398 + $0xc] sm:$0x1]
        %v689 = vsel %vm401, %v612, %v688
        %690 = vst [vmem:[%s398 + $0xc] sm:$0x1] %v689
        %v691 = vld [vmem:[%s398 + $0x10] sm:$0xf]
        %v692 = vsel %vm678, %v619, %v691
        %693 = vst [vmem:[%s398 + $0x10] sm:$0xf] %v692
        %v694 = vld [vmem:[%s398 + $0x14] sm:$0x1]
        %v695 = vsel %vm401, %v620, %v694
        %696 = vst [vmem:[%s398 + $0x14] sm:$0x1] %v695
        %v697 = vld [vmem:[%s398 + $0x18] sm:$0xf]
        %v698 = vsel %vm678, %v627, %v697
        %699 = vst [vmem:[%s398 + $0x18] sm:$0xf] %v698
        %v700 = vld [vmem:[%s398 + $0x1c] sm:$0x1]
        %v701 = vsel %vm401, %v628, %v700
        %702 = vst [vmem:[%s398 + $0x1c] sm:$0x1] %v701
        %v703 = vld [vmem:[%s398 + $0x20] sm:$0xf]
        %v704 = vsel %vm678, %v635, %v703
        %705 = vst [vmem:[%s398 + $0x20] sm:$0xf] %v704
        %v706 = vld [vmem:[%s398 + $0x24] sm:$0x1]
        %v707 = vsel %vm401, %v636, %v706
        %708 = vst [vmem:[%s398 + $0x24] sm:$0x1] %v707
        %v709 = vld [vmem:[%s398 + $0x28] sm:$0xf]
        %v710 = vsel %vm678, %v643, %v709
        %711 = vst [vmem:[%s398 + $0x28] sm:$0xf] %v710
        %v712 = vld [vmem:[%s398 + $0x2c] sm:$0x1]
        %v713 = vsel %vm401, %v644, %v712
        %714 = vst [vmem:[%s398 + $0x2c] sm:$0x1] %v713
        %v715 = vld [vmem:[%s398 + $0x30] sm:$0xf]
        %v716 = vsel %vm678, %v651, %v715
        %717 = vst [vmem:[%s398 + $0x30] sm:$0xf] %v716
        %v718 = vld [vmem:[%s398 + $0x34] sm:$0x1]
        %v719 = vsel %vm401, %v652, %v718
        %720 = vst [vmem:[%s398 + $0x34] sm:$0x1] %v719
        %v721 = vld [vmem:[%s398 + $0x38] sm:$0xf]
        %v722 = vsel %vm678, %v659, %v721
        %723 = vst [vmem:[%s398 + $0x38] sm:$0xf] %v722
        %v724 = vld [vmem:[%s398 + $0x3c] sm:$0x1]
        %v725 = vsel %vm401, %v660, %v724
        %726 = vst [vmem:[%s398 + $0x3c] sm:$0x1] %v725
        %v727 = vld [vmem:[#allocation2] sm:$0xf]
        %v728 = vld [vmem:[#allocation2 + $0x8] sm:$0xf]
        %v729 = vld [vmem:[#allocation2 + $0x10] sm:$0xf]
        %v730 = vld [vmem:[#allocation2 + $0x18] sm:$0xf]
        %v731 = vld [vmem:[#allocation2 + $0x20] sm:$0xf]
        %v732 = vld [vmem:[#allocation2 + $0x28] sm:$0xf]
        %v733 = vld [vmem:[#allocation2 + $0x30] sm:$0xf]
        %v734 = vld [vmem:[#allocation2 + $0x38] sm:$0xf]
        %v735 = vld [vmem:[#allocation8] sm:$0xf]
        %v736 = vld [vmem:[#allocation8 + $0x4] sm:$0xf]
        %v737 = vld [vmem:[#allocation8 + $0x8] sm:$0xf]
        %v738 = vld [vmem:[#allocation8 + $0xc] sm:$0xf]
        %v739 = vld [vmem:[#allocation8 + $0x10] sm:$0xf]
        %v740 = vld [vmem:[#allocation8 + $0x14] sm:$0xf]
        %v741 = vld [vmem:[#allocation8 + $0x18] sm:$0xf]
        %v742 = vld [vmem:[#allocation8 + $0x1c] sm:$0xf]
        %v743 = vld [vmem:[#allocation8 + $0x20] sm:$0xf]
        %v744 = vld [vmem:[#allocation8 + $0x24] sm:$0xf]
        %v745 = vld [vmem:[#allocation8 + $0x28] sm:$0xf]
        %v746 = vld [vmem:[#allocation8 + $0x2c] sm:$0xf]
        %v747 = vld [vmem:[#allocation8 + $0x30] sm:$0xf]
        %v748 = vld [vmem:[#allocation8 + $0x34] sm:$0xf]
        %v749 = vld [vmem:[#allocation8 + $0x38] sm:$0xf]
        %v750 = vld [vmem:[#allocation8 + $0x3c] sm:$0xf]
        %v751 = vld [vmem:[#allocation2 + $0x4] sm:$0x1]
        %v752 = vld [vmem:[#allocation2 + $0xc] sm:$0x1]
        %v753 = vld [vmem:[#allocation2 + $0x14] sm:$0x1]
        %v754 = vld [vmem:[#allocation2 + $0x1c] sm:$0x1]
        %v755 = vld [vmem:[#allocation2 + $0x24] sm:$0x1]
        %v756 = vld [vmem:[#allocation2 + $0x2c] sm:$0x1]
        %v757 = vld [vmem:[#allocation2 + $0x34] sm:$0x1]
        %v758 = vld [vmem:[#allocation2 + $0x3c] sm:$0x1]
        %vm759 = vsmask.f32 3328
        %vm760 = vsmask.f32 7440
        %vm761 = vmor %vm759, %vm760
        %v763 = vshrl.u32 %v727, 16
        %v765 = vrot.slane %v763, 4
        %v766 = vshll.u32 %v727, 16
        %v768 = vrot.slane %v766, 5
        %v769 = vor.u32 %v765, %v768
        %v770 = vrot.slane %v769, 4
        %v772 = vshll.u32 %v751, 16
        %v774 = vrot.slane %v772, 5
        %v775 = vsel %vm761, %v770, %v774
        %v777 = vshrl.u32 %v728, 16
        %v779 = vrot.slane %v777, 4
        %v780 = vshll.u32 %v728, 16
        %v782 = vrot.slane %v780, 5
        %v783 = vor.u32 %v779, %v782
        %v784 = vrot.slane %v783, 4
        %v786 = vshll.u32 %v752, 16
        %v788 = vrot.slane %v786, 5
        %v789 = vsel %vm761, %v784, %v788
        %v791 = vshrl.u32 %v729, 16
        %v793 = vrot.slane %v791, 4
        %v794 = vshll.u32 %v729, 16
        %v796 = vrot.slane %v794, 5
        %v797 = vor.u32 %v793, %v796
        %v798 = vrot.slane %v797, 4
        %v800 = vshll.u32 %v753, 16
        %v802 = vrot.slane %v800, 5
        %v803 = vsel %vm761, %v798, %v802
        %v805 = vshrl.u32 %v730, 16
        %v807 = vrot.slane %v805, 4
        %v808 = vshll.u32 %v730, 16
        %v810 = vrot.slane %v808, 5
        %v811 = vor.u32 %v807, %v810
        %v812 = vrot.slane %v811, 4
        %v814 = vshll.u32 %v754, 16
        %v816 = vrot.slane %v814, 5
        %v817 = vsel %vm761, %v812, %v816
        %v819 = vshrl.u32 %v731, 16
        %v821 = vrot.slane %v819, 4
        %v822 = vshll.u32 %v731, 16
        %v824 = vrot.slane %v822, 5
        %v825 = vor.u32 %v821, %v824
        %v826 = vrot.slane %v825, 4
        %v828 = vshll.u32 %v755, 16
        %v830 = vrot.slane %v828, 5
        %v831 = vsel %vm761, %v826, %v830
        %v833 = vshrl.u32 %v732, 16
        %v835 = vrot.slane %v833, 4
        %v836 = vshll.u32 %v732, 16
        %v838 = vrot.slane %v836, 5
        %v839 = vor.u32 %v835, %v838
        %v840 = vrot.slane %v839, 4
        %v842 = vshll.u32 %v756, 16
        %v844 = vrot.slane %v842, 5
        %v845 = vsel %vm761, %v840, %v844
        %v847 = vshrl.u32 %v733, 16
        %v849 = vrot.slane %v847, 4
        %v850 = vshll.u32 %v733, 16
        %v852 = vrot.slane %v850, 5
        %v853 = vor.u32 %v849, %v852
        %v854 = vrot.slane %v853, 4
        %v856 = vshll.u32 %v757, 16
        %v858 = vrot.slane %v856, 5
        %v859 = vsel %vm761, %v854, %v858
        %v861 = vshrl.u32 %v734, 16
        %v863 = vrot.slane %v861, 4
        %v864 = vshll.u32 %v734, 16
        %v866 = vrot.slane %v864, 5
        %v867 = vor.u32 %v863, %v866
        %v868 = vrot.slane %v867, 4
        %v870 = vshll.u32 %v758, 16
        %v872 = vrot.slane %v870, 5
        %v873 = vsel %vm761, %v868, %v872
        %s874 = scalar_lea.vmem [#allocation8], 64
        %v875 = vld [vmem:[%s874] sm:$0xf]
        %v876 = vld [vmem:[%s874 + $0x4] sm:$0xf]
        %v877 = vld [vmem:[%s874 + $0x8] sm:$0xf]
        %v878 = vld [vmem:[%s874 + $0xc] sm:$0xf]
        %v879 = vld [vmem:[%s874 + $0x10] sm:$0xf]
        %v880 = vld [vmem:[%s874 + $0x14] sm:$0xf]
        %v881 = vld [vmem:[%s874 + $0x18] sm:$0xf]
        %v882 = vld [vmem:[%s874 + $0x1c] sm:$0xf]
        %v883 = vld [vmem:[%s874 + $0x20] sm:$0xf]
        %v884 = vld [vmem:[%s874 + $0x24] sm:$0xf]
        %v885 = vld [vmem:[%s874 + $0x28] sm:$0xf]
        %v886 = vld [vmem:[%s874 + $0x2c] sm:$0xf]
        %v887 = vld [vmem:[%s874 + $0x30] sm:$0xf]
        %v888 = vld [vmem:[%s874 + $0x34] sm:$0xf]
        %v889 = vld [vmem:[%s874 + $0x38] sm:$0xf]
        %v890 = vld [vmem:[%s874 + $0x3c] sm:$0xf]
        %v891 = vunpack.c.l.b16 %v775
        %v892 = vunpack.c.l.b16 %v789
        %v893 = vunpack.c.l.b16 %v803
        %v894 = vunpack.c.l.b16 %v817
        %v895 = vunpack.c.l.b16 %v831
        %v896 = vunpack.c.l.b16 %v845
        %v897 = vunpack.c.l.b16 %v859
        %v898 = vunpack.c.l.b16 %v873
        %v899 = vpack.c.b16 %v892, %v891
        %v900 = vpack.c.b16 %v894, %v893
        %v901 = vpack.c.b16 %v896, %v895
        %v902 = vpack.c.b16 %v898, %v897
        %v923 = vunpack.c.l.b16 %v875
        %v924 = vunpack.c.l.b16 %v876
        %v925 = vunpack.c.l.b16 %v877
        %v926 = vunpack.c.l.b16 %v878
        %v927 = vunpack.c.l.b16 %v879
        %v928 = vunpack.c.l.b16 %v880
        %v929 = vunpack.c.l.b16 %v881
        %v930 = vunpack.c.l.b16 %v882
        %v931 = vunpack.c.l.b16 %v883
        %v932 = vunpack.c.l.b16 %v884
        %v933 = vunpack.c.l.b16 %v885
        %v934 = vunpack.c.l.b16 %v886
        %v935 = vunpack.c.l.b16 %v887
        %v936 = vunpack.c.l.b16 %v888
        %v937 = vunpack.c.l.b16 %v889
        %v938 = vunpack.c.l.b16 %v890
        %v939 = vpack.c.b16 %v924, %v923
        %v940 = vpack.c.b16 %v926, %v925
        %v941 = vpack.c.b16 %v928, %v927
        %v942 = vpack.c.b16 %v930, %v929
        %v943 = vpack.c.b16 %v932, %v931
        %v944 = vpack.c.b16 %v934, %v933
        %v945 = vpack.c.b16 %v936, %v935
        %v946 = vpack.c.b16 %v938, %v937
        %955 = vmatpush.bf16.msra.mxu0 %v946
        %956 = vmatpush.bf16.msra.mxu0 %v945
        %957 = vmatpush.bf16.msra.mxu0 %v944
        %958 = vmatpush.bf16.msra.mxu0 %v943
        %959 = vmatpush.bf16.msra.mxu0 %v942
        %960 = vmatpush.bf16.msra.mxu0 %v941
        %961 = vmatpush.bf16.msra.mxu0 %v940
        %962 = vmatpush.bf16.msra.mxu0 %v939
        %963 = vmatmul.bf16.gmra.mxu0 %v899
        %v964 = vpop.f32.mrf.mxu0
        %v965 = vadd.f32 0.0, %v964
        %v966 = vpop.f32.mrf.mxu0
        %v967 = vadd.f32 0.0, %v966
        %968 = vmatmul.bf16.gmra.mxu0 %v900
        %v969 = vpop.f32.mrf.mxu0
        %v970 = vadd.f32 0.0, %v969
        %v971 = vpop.f32.mrf.mxu0
        %v972 = vadd.f32 0.0, %v971
        %973 = vmatmul.bf16.gmra.mxu0 %v901
        %v974 = vpop.f32.mrf.mxu0
        %v975 = vadd.f32 0.0, %v974
        %v976 = vpop.f32.mrf.mxu0
        %v977 = vadd.f32 0.0, %v976
        %978 = vmatmul.bf16.gmra.mxu0 %v902
        %v979 = vpop.f32.mrf.mxu0
        %v980 = vadd.f32 0.0, %v979
        %v981 = vpop.f32.mrf.mxu0
        %v982 = vadd.f32 0.0, %v981
        %983 = vdwg.mxu0
        %v992 = vunpack.c.l.b16 %v727
        %v993 = vunpack.c.l.b16 %v728
        %v994 = vunpack.c.l.b16 %v729
        %v995 = vunpack.c.l.b16 %v730
        %v996 = vunpack.c.l.b16 %v731
        %v997 = vunpack.c.l.b16 %v732
        %v998 = vunpack.c.l.b16 %v733
        %v999 = vunpack.c.l.b16 %v734
        %v1000 = vpack.c.b16 %v993, %v992
        %v1001 = vpack.c.b16 %v995, %v994
        %v1002 = vpack.c.b16 %v997, %v996
        %v1003 = vpack.c.b16 %v999, %v998
        %v1024 = vunpack.c.l.b16 %v735
        %v1025 = vunpack.c.l.b16 %v736
        %v1026 = vunpack.c.l.b16 %v737
        %v1027 = vunpack.c.l.b16 %v738
        %v1028 = vunpack.c.l.b16 %v739
        %v1029 = vunpack.c.l.b16 %v740
        %v1030 = vunpack.c.l.b16 %v741
        %v1031 = vunpack.c.l.b16 %v742
        %v1032 = vunpack.c.l.b16 %v743
        %v1033 = vunpack.c.l.b16 %v744
        %v1034 = vunpack.c.l.b16 %v745
        %v1035 = vunpack.c.l.b16 %v746
        %v1036 = vunpack.c.l.b16 %v747
        %v1037 = vunpack.c.l.b16 %v748
        %v1038 = vunpack.c.l.b16 %v749
        %v1039 = vunpack.c.l.b16 %v750
        %v1040 = vpack.c.b16 %v1025, %v1024
        %v1041 = vpack.c.b16 %v1027, %v1026
        %v1042 = vpack.c.b16 %v1029, %v1028
        %v1043 = vpack.c.b16 %v1031, %v1030
        %v1044 = vpack.c.b16 %v1033, %v1032
        %v1045 = vpack.c.b16 %v1035, %v1034
        %v1046 = vpack.c.b16 %v1037, %v1036
        %v1047 = vpack.c.b16 %v1039, %v1038
        %1056 = vmatpush.bf16.msra.mxu0 %v1047
        %1057 = vmatpush.bf16.msra.mxu0 %v1046
        %1058 = vmatpush.bf16.msra.mxu0 %v1045
        %1059 = vmatpush.bf16.msra.mxu0 %v1044
        %1060 = vmatpush.bf16.msra.mxu0 %v1043
        %1061 = vmatpush.bf16.msra.mxu0 %v1042
        %1062 = vmatpush.bf16.msra.mxu0 %v1041
        %1063 = vmatpush.bf16.msra.mxu0 %v1040
        %1064 = vmatmul.bf16.gmra.mxu0 %v1000
        %v1065 = vpop.f32.mrf.mxu0
        %v1066 = vadd.f32 %v965, %v1065
        %v1067 = vpop.f32.mrf.mxu0
        %v1068 = vadd.f32 %v967, %v1067
        %1069 = vmatmul.bf16.gmra.mxu0 %v1001
        %v1070 = vpop.f32.mrf.mxu0
        %v1071 = vadd.f32 %v970, %v1070
        %v1072 = vpop.f32.mrf.mxu0
        %v1073 = vadd.f32 %v972, %v1072
        %1074 = vmatmul.bf16.gmra.mxu0 %v1002
        %v1075 = vpop.f32.mrf.mxu0
        %v1076 = vadd.f32 %v975, %v1075
        %v1077 = vpop.f32.mrf.mxu0
        %v1078 = vadd.f32 %v977, %v1077
        %1079 = vmatmul.bf16.gmra.mxu0 %v1003
        %v1080 = vpop.f32.mrf.mxu0
        %v1081 = vadd.f32 %v980, %v1080
        %v1082 = vpop.f32.mrf.mxu0
        %v1083 = vadd.f32 %v982, %v1082
        %1084 = vdwg.mxu0
        %v1085 = vld [vmem:[#allocation2] sm:$0xe]
        %v1086 = vld [vmem:[#allocation2 + $0x8] sm:$0xe]
        %v1087 = vld [vmem:[#allocation2 + $0x10] sm:$0xe]
        %v1088 = vld [vmem:[#allocation2 + $0x18] sm:$0xe]
        %v1089 = vld [vmem:[#allocation2 + $0x20] sm:$0xe]
        %v1090 = vld [vmem:[#allocation2 + $0x28] sm:$0xe]
        %v1091 = vld [vmem:[#allocation2 + $0x30] sm:$0xe]
        %v1092 = vld [vmem:[#allocation2 + $0x38] sm:$0xe]
        %vm1109 = vcmask 1042432
        %vm1110 = vcmask 1046532
        %vm1111 = vmor %vm1109, %vm1110
        %v1112 = vrot.slane %v1085, 5
        %v1113 = vrot.slane %v1112, 4
        %v1114 = vrot.slane %v751, 5
        %v1115 = vsel %vm1111, %v1113, %v1114
        %v1116 = vrot.slane %v1086, 5
        %v1117 = vrot.slane %v1116, 4
        %v1118 = vrot.slane %v752, 5
        %v1119 = vsel %vm1111, %v1117, %v1118
        %v1120 = vrot.slane %v1087, 5
        %v1121 = vrot.slane %v1120, 4
        %v1122 = vrot.slane %v753, 5
        %v1123 = vsel %vm1111, %v1121, %v1122
        %v1124 = vrot.slane %v1088, 5
        %v1125 = vrot.slane %v1124, 4
        %v1126 = vrot.slane %v754, 5
        %v1127 = vsel %vm1111, %v1125, %v1126
        %v1128 = vrot.slane %v1089, 5
        %v1129 = vrot.slane %v1128, 4
        %v1130 = vrot.slane %v755, 5
        %v1131 = vsel %vm1111, %v1129, %v1130
        %v1132 = vrot.slane %v1090, 5
        %v1133 = vrot.slane %v1132, 4
        %v1134 = vrot.slane %v756, 5
        %v1135 = vsel %vm1111, %v1133, %v1134
        %v1136 = vrot.slane %v1091, 5
        %v1137 = vrot.slane %v1136, 4
        %v1138 = vrot.slane %v757, 5
        %v1139 = vsel %vm1111, %v1137, %v1138
        %v1140 = vrot.slane %v1092, 5
        %v1141 = vrot.slane %v1140, 4
        %v1142 = vrot.slane %v758, 5
        %v1143 = vsel %vm1111, %v1141, %v1142
        %s1144 = scalar_lea.vmem [#allocation8], 128
        %v1145 = vld [vmem:[%s1144] sm:$0xf]
        %v1146 = vld [vmem:[%s1144 + $0x4] sm:$0xf]
        %v1147 = vld [vmem:[%s1144 + $0x8] sm:$0xf]
        %v1148 = vld [vmem:[%s1144 + $0xc] sm:$0xf]
        %v1149 = vld [vmem:[%s1144 + $0x10] sm:$0xf]
        %v1150 = vld [vmem:[%s1144 + $0x14] sm:$0xf]
        %v1151 = vld [vmem:[%s1144 + $0x18] sm:$0xf]
        %v1152 = vld [vmem:[%s1144 + $0x1c] sm:$0xf]
        %v1153 = vld [vmem:[%s1144 + $0x20] sm:$0xf]
        %v1154 = vld [vmem:[%s1144 + $0x24] sm:$0xf]
        %v1155 = vld [vmem:[%s1144 + $0x28] sm:$0xf]
        %v1156 = vld [vmem:[%s1144 + $0x2c] sm:$0xf]
        %v1157 = vld [vmem:[%s1144 + $0x30] sm:$0xf]
        %v1158 = vld [vmem:[%s1144 + $0x34] sm:$0xf]
        %v1159 = vld [vmem:[%s1144 + $0x38] sm:$0xf]
        %v1160 = vld [vmem:[%s1144 + $0x3c] sm:$0xf]
        %v1161 = vunpack.c.l.b16 %v1115
        %v1162 = vunpack.c.l.b16 %v1119
        %v1163 = vunpack.c.l.b16 %v1123
        %v1164 = vunpack.c.l.b16 %v1127
        %v1165 = vunpack.c.l.b16 %v1131
        %v1166 = vunpack.c.l.b16 %v1135
        %v1167 = vunpack.c.l.b16 %v1139
        %v1168 = vunpack.c.l.b16 %v1143
        %v1169 = vpack.c.b16 %v1162, %v1161
        %v1170 = vpack.c.b16 %v1164, %v1163
        %v1171 = vpack.c.b16 %v1166, %v1165
        %v1172 = vpack.c.b16 %v1168, %v1167
        %v1193 = vunpack.c.l.b16 %v1145
        %v1194 = vunpack.c.l.b16 %v1146
        %v1195 = vunpack.c.l.b16 %v1147
        %v1196 = vunpack.c.l.b16 %v1148
        %v1197 = vunpack.c.l.b16 %v1149
        %v1198 = vunpack.c.l.b16 %v1150
        %v1199 = vunpack.c.l.b16 %v1151
        %v1200 = vunpack.c.l.b16 %v1152
        %v1201 = vunpack.c.l.b16 %v1153
        %v1202 = vunpack.c.l.b16 %v1154
        %v1203 = vunpack.c.l.b16 %v1155
        %v1204 = vunpack.c.l.b16 %v1156
        %v1205 = vunpack.c.l.b16 %v1157
        %v1206 = vunpack.c.l.b16 %v1158
        %v1207 = vunpack.c.l.b16 %v1159
        %v1208 = vunpack.c.l.b16 %v1160
        %v1209 = vpack.c.b16 %v1194, %v1193
        %v1210 = vpack.c.b16 %v1196, %v1195
        %v1211 = vpack.c.b16 %v1198, %v1197
        %v1212 = vpack.c.b16 %v1200, %v1199
        %v1213 = vpack.c.b16 %v1202, %v1201
        %v1214 = vpack.c.b16 %v1204, %v1203
        %v1215 = vpack.c.b16 %v1206, %v1205
        %v1216 = vpack.c.b16 %v1208, %v1207
        %1225 = vmatpush.bf16.msra.mxu0 %v1216
        %1226 = vmatpush.bf16.msra.mxu0 %v1215
        %1227 = vmatpush.bf16.msra.mxu0 %v1214
        %1228 = vmatpush.bf16.msra.mxu0 %v1213
        %1229 = vmatpush.bf16.msra.mxu0 %v1212
        %1230 = vmatpush.bf16.msra.mxu0 %v1211
        %1231 = vmatpush.bf16.msra.mxu0 %v1210
        %1232 = vmatpush.bf16.msra.mxu0 %v1209
        %1233 = vmatmul.bf16.gmra.mxu0 %v1169
        %v1234 = vpop.f32.mrf.mxu0
        %v1235 = vadd.f32 0.0, %v1234
        %v1236 = vpop.f32.mrf.mxu0
        %v1237 = vadd.f32 0.0, %v1236
        %1238 = vmatmul.bf16.gmra.mxu0 %v1170
        %v1239 = vpop.f32.mrf.mxu0
        %v1240 = vadd.f32 0.0, %v1239
        %v1241 = vpop.f32.mrf.mxu0
        %v1242 = vadd.f32 0.0, %v1241
        %1243 = vmatmul.bf16.gmra.mxu0 %v1171
        %v1244 = vpop.f32.mrf.mxu0
        %v1245 = vadd.f32 0.0, %v1244
        %v1246 = vpop.f32.mrf.mxu0
        %v1247 = vadd.f32 0.0, %v1246
        %1248 = vmatmul.bf16.gmra.mxu0 %v1172
        %v1249 = vpop.f32.mrf.mxu0
        %v1250 = vadd.f32 0.0, %v1249
        %v1251 = vpop.f32.mrf.mxu0
        %v1252 = vadd.f32 0.0, %v1251
        %1253 = vdwg.mxu0
        %v1254 = vadd.f32 %v1066, %v1235
        %v1255 = vadd.f32 %v1068, %v1237
        %v1256 = vadd.f32 %v1071, %v1240
        %v1257 = vadd.f32 %v1073, %v1242
        %v1258 = vadd.f32 %v1076, %v1245
        %v1259 = vadd.f32 %v1078, %v1247
        %v1260 = vadd.f32 %v1081, %v1250
        %v1261 = vadd.f32 %v1083, %v1252
        %v1262 = vld [vmem:[%s398] sm:$0xf]
        %v1263 = vld [vmem:[%s398 + $0x8] sm:$0xf]
        %v1264 = vld [vmem:[%s398 + $0x10] sm:$0xf]
        %v1265 = vld [vmem:[%s398 + $0x18] sm:$0xf]
        %v1266 = vld [vmem:[%s398 + $0x20] sm:$0xf]
        %v1267 = vld [vmem:[%s398 + $0x28] sm:$0xf]
        %v1268 = vld [vmem:[%s398 + $0x30] sm:$0xf]
        %v1269 = vld [vmem:[%s398 + $0x38] sm:$0xf]
        %s1270 = scalar_lea.vmem [#allocation8], 192
        %v1271 = vld [vmem:[%s1270] sm:$0xf]
        %v1272 = vld [vmem:[%s1270 + $0x4] sm:$0xf]
        %v1273 = vld [vmem:[%s1270 + $0x8] sm:$0xf]
        %v1274 = vld [vmem:[%s1270 + $0xc] sm:$0xf]
        %v1275 = vld [vmem:[%s1270 + $0x10] sm:$0xf]
        %v1276 = vld [vmem:[%s1270 + $0x14] sm:$0xf]
        %v1277 = vld [vmem:[%s1270 + $0x18] sm:$0xf]
        %v1278 = vld [vmem:[%s1270 + $0x1c] sm:$0xf]
        %v1279 = vld [vmem:[%s1270 + $0x20] sm:$0xf]
        %v1280 = vld [vmem:[%s1270 + $0x24] sm:$0xf]
        %v1281 = vld [vmem:[%s1270 + $0x28] sm:$0xf]
        %v1282 = vld [vmem:[%s1270 + $0x2c] sm:$0xf]
        %v1283 = vld [vmem:[%s1270 + $0x30] sm:$0xf]
        %v1284 = vld [vmem:[%s1270 + $0x34] sm:$0xf]
        %v1285 = vld [vmem:[%s1270 + $0x38] sm:$0xf]
        %v1286 = vld [vmem:[%s1270 + $0x3c] sm:$0xf]
        %v1295 = vunpack.c.l.b16 %v1262
        %v1296 = vunpack.c.l.b16 %v1263
        %v1297 = vunpack.c.l.b16 %v1264
        %v1298 = vunpack.c.l.b16 %v1265
        %v1299 = vunpack.c.l.b16 %v1266
        %v1300 = vunpack.c.l.b16 %v1267
        %v1301 = vunpack.c.l.b16 %v1268
        %v1302 = vunpack.c.l.b16 %v1269
        %v1303 = vpack.c.b16 %v1296, %v1295
        %v1304 = vpack.c.b16 %v1298, %v1297
        %v1305 = vpack.c.b16 %v1300, %v1299
        %v1306 = vpack.c.b16 %v1302, %v1301
        %v1327 = vunpack.c.l.b16 %v1271
        %v1328 = vunpack.c.l.b16 %v1272
        %v1329 = vunpack.c.l.b16 %v1273
        %v1330 = vunpack.c.l.b16 %v1274
        %v1331 = vunpack.c.l.b16 %v1275
        %v1332 = vunpack.c.l.b16 %v1276
        %v1333 = vunpack.c.l.b16 %v1277
        %v1334 = vunpack.c.l.b16 %v1278
        %v1335 = vunpack.c.l.b16 %v1279
        %v1336 = vunpack.c.l.b16 %v1280
        %v1337 = vunpack.c.l.b16 %v1281
        %v1338 = vunpack.c.l.b16 %v1282
        %v1339 = vunpack.c.l.b16 %v1283
        %v1340 = vunpack.c.l.b16 %v1284
        %v1341 = vunpack.c.l.b16 %v1285
        %v1342 = vunpack.c.l.b16 %v1286
        %v1343 = vpack.c.b16 %v1328, %v1327
        %v1344 = vpack.c.b16 %v1330, %v1329
        %v1345 = vpack.c.b16 %v1332, %v1331
        %v1346 = vpack.c.b16 %v1334, %v1333
        %v1347 = vpack.c.b16 %v1336, %v1335
        %v1348 = vpack.c.b16 %v1338, %v1337
        %v1349 = vpack.c.b16 %v1340, %v1339
        %v1350 = vpack.c.b16 %v1342, %v1341
        %1359 = vmatpush.bf16.msra.mxu0 %v1350
        %1360 = vmatpush.bf16.msra.mxu0 %v1349
        %1361 = vmatpush.bf16.msra.mxu0 %v1348
        %1362 = vmatpush.bf16.msra.mxu0 %v1347
        %1363 = vmatpush.bf16.msra.mxu0 %v1346
        %1364 = vmatpush.bf16.msra.mxu0 %v1345
        %1365 = vmatpush.bf16.msra.mxu0 %v1344
        %1366 = vmatpush.bf16.msra.mxu0 %v1343
        %1367 = vmatmul.bf16.gmra.mxu0 %v1303
        %v1368 = vpop.f32.mrf.mxu0
        %v1369 = vadd.f32 0.0, %v1368
        %v1370 = vpop.f32.mrf.mxu0
        %v1371 = vadd.f32 0.0, %v1370
        %1372 = vmatmul.bf16.gmra.mxu0 %v1304
        %v1373 = vpop.f32.mrf.mxu0
        %v1374 = vadd.f32 0.0, %v1373
        %v1375 = vpop.f32.mrf.mxu0
        %v1376 = vadd.f32 0.0, %v1375
        %1377 = vmatmul.bf16.gmra.mxu0 %v1305
        %v1378 = vpop.f32.mrf.mxu0
        %v1379 = vadd.f32 0.0, %v1378
        %v1380 = vpop.f32.mrf.mxu0
        %v1381 = vadd.f32 0.0, %v1380
        %1382 = vmatmul.bf16.gmra.mxu0 %v1306
        %v1383 = vpop.f32.mrf.mxu0
        %v1384 = vadd.f32 0.0, %v1383
        %v1385 = vpop.f32.mrf.mxu0
        %v1386 = vadd.f32 0.0, %v1385
        %1387 = vdwg.mxu0
        %v1388 = vadd.f32 %v1254, %v1369
        %v1389 = vadd.f32 %v1255, %v1371
        %v1390 = vadd.f32 %v1256, %v1374
        %v1391 = vadd.f32 %v1257, %v1376
        %v1392 = vadd.f32 %v1258, %v1379
        %v1393 = vadd.f32 %v1259, %v1381
        %v1394 = vadd.f32 %v1260, %v1384
        %v1395 = vadd.f32 %v1261, %v1386
        %v1396 = vld [vmem:[%s398] sm:$0xf]
        %v1397 = vld [vmem:[%s398 + $0x4] sm:$0x1]
        %v1398 = vld [vmem:[%s398 + $0x8] sm:$0xf]
        %v1399 = vld [vmem:[%s398 + $0xc] sm:$0x1]
        %v1400 = vld [vmem:[%s398 + $0x10] sm:$0xf]
        %v1401 = vld [vmem:[%s398 + $0x14] sm:$0x1]
        %v1402 = vld [vmem:[%s398 + $0x18] sm:$0xf]
        %v1403 = vld [vmem:[%s398 + $0x1c] sm:$0x1]
        %v1404 = vld [vmem:[%s398 + $0x20] sm:$0xf]
        %v1405 = vld [vmem:[%s398 + $0x24] sm:$0x1]
        %v1406 = vld [vmem:[%s398 + $0x28] sm:$0xf]
        %v1407 = vld [vmem:[%s398 + $0x2c] sm:$0x1]
        %v1408 = vld [vmem:[%s398 + $0x30] sm:$0xf]
        %v1409 = vld [vmem:[%s398 + $0x34] sm:$0x1]
        %v1410 = vld [vmem:[%s398 + $0x38] sm:$0xf]
        %v1411 = vld [vmem:[%s398 + $0x3c] sm:$0x1]
        %v1413 = vshrl.u32 %v1396, 16
        %v1415 = vrot.slane %v1413, 4
        %v1416 = vshll.u32 %v1396, 16
        %v1418 = vrot.slane %v1416, 5
        %v1419 = vor.u32 %v1415, %v1418
        %v1420 = vrot.slane %v1419, 4
        %v1422 = vshll.u32 %v1397, 16
        %v1424 = vrot.slane %v1422, 5
        %v1425 = vsel %vm761, %v1420, %v1424
        %v1427 = vshrl.u32 %v1398, 16
        %v1429 = vrot.slane %v1427, 4
        %v1430 = vshll.u32 %v1398, 16
        %v1432 = vrot.slane %v1430, 5
        %v1433 = vor.u32 %v1429, %v1432
        %v1434 = vrot.slane %v1433, 4
        %v1436 = vshll.u32 %v1399, 16
        %v1438 = vrot.slane %v1436, 5
        %v1439 = vsel %vm761, %v1434, %v1438
        %v1441 = vshrl.u32 %v1400, 16
        %v1443 = vrot.slane %v1441, 4
        %v1444 = vshll.u32 %v1400, 16
        %v1446 = vrot.slane %v1444, 5
        %v1447 = vor.u32 %v1443, %v1446
        %v1448 = vrot.slane %v1447, 4
        %v1450 = vshll.u32 %v1401, 16
        %v1452 = vrot.slane %v1450, 5
        %v1453 = vsel %vm761, %v1448, %v1452
        %v1455 = vshrl.u32 %v1402, 16
        %v1457 = vrot.slane %v1455, 4
        %v1458 = vshll.u32 %v1402, 16
        %v1460 = vrot.slane %v1458, 5
        %v1461 = vor.u32 %v1457, %v1460
        %v1462 = vrot.slane %v1461, 4
        %v1464 = vshll.u32 %v1403, 16
        %v1466 = vrot.slane %v1464, 5
        %v1467 = vsel %vm761, %v1462, %v1466
        %v1469 = vshrl.u32 %v1404, 16
        %v1471 = vrot.slane %v1469, 4
        %v1472 = vshll.u32 %v1404, 16
        %v1474 = vrot.slane %v1472, 5
        %v1475 = vor.u32 %v1471, %v1474
        %v1476 = vrot.slane %v1475, 4
        %v1478 = vshll.u32 %v1405, 16
        %v1480 = vrot.slane %v1478, 5
        %v1481 = vsel %vm761, %v1476, %v1480
        %v1483 = vshrl.u32 %v1406, 16
        %v1485 = vrot.slane %v1483, 4
        %v1486 = vshll.u32 %v1406, 16
        %v1488 = vrot.slane %v1486, 5
        %v1489 = vor.u32 %v1485, %v1488
        %v1490 = vrot.slane %v1489, 4
        %v1492 = vshll.u32 %v1407, 16
        %v1494 = vrot.slane %v1492, 5
        %v1495 = vsel %vm761, %v1490, %v1494
        %v1497 = vshrl.u32 %v1408, 16
        %v1499 = vrot.slane %v1497, 4
        %v1500 = vshll.u32 %v1408, 16
        %v1502 = vrot.slane %v1500, 5
        %v1503 = vor.u32 %v1499, %v1502
        %v1504 = vrot.slane %v1503, 4
        %v1506 = vshll.u32 %v1409, 16
        %v1508 = vrot.slane %v1506, 5
        %v1509 = vsel %vm761, %v1504, %v1508
        %v1511 = vshrl.u32 %v1410, 16
        %v1513 = vrot.slane %v1511, 4
        %v1514 = vshll.u32 %v1410, 16
        %v1516 = vrot.slane %v1514, 5
        %v1517 = vor.u32 %v1513, %v1516
        %v1518 = vrot.slane %v1517, 4
        %v1520 = vshll.u32 %v1411, 16
        %v1522 = vrot.slane %v1520, 5
        %v1523 = vsel %vm761, %v1518, %v1522
        %s1524 = scalar_lea.vmem [#allocation8], 256
        %v1525 = vld [vmem:[%s1524] sm:$0xf]
        %v1526 = vld [vmem:[%s1524 + $0x4] sm:$0xf]
        %v1527 = vld [vmem:[%s1524 + $0x8] sm:$0xf]
        %v1528 = vld [vmem:[%s1524 + $0xc] sm:$0xf]
        %v1529 = vld [vmem:[%s1524 + $0x10] sm:$0xf]
        %v1530 = vld [vmem:[%s1524 + $0x14] sm:$0xf]
        %v1531 = vld [vmem:[%s1524 + $0x18] sm:$0xf]
        %v1532 = vld [vmem:[%s1524 + $0x1c] sm:$0xf]
        %v1533 = vld [vmem:[%s1524 + $0x20] sm:$0xf]
        %v1534 = vld [vmem:[%s1524 + $0x24] sm:$0xf]
        %v1535 = vld [vmem:[%s1524 + $0x28] sm:$0xf]
        %v1536 = vld [vmem:[%s1524 + $0x2c] sm:$0xf]
        %v1537 = vld [vmem:[%s1524 + $0x30] sm:$0xf]
        %v1538 = vld [vmem:[%s1524 + $0x34] sm:$0xf]
        %v1539 = vld [vmem:[%s1524 + $0x38] sm:$0xf]
        %v1540 = vld [vmem:[%s1524 + $0x3c] sm:$0xf]
        %v1541 = vunpack.c.l.b16 %v1425
        %v1542 = vunpack.c.l.b16 %v1439
        %v1543 = vunpack.c.l.b16 %v1453
        %v1544 = vunpack.c.l.b16 %v1467
        %v1545 = vunpack.c.l.b16 %v1481
        %v1546 = vunpack.c.l.b16 %v1495
        %v1547 = vunpack.c.l.b16 %v1509
        %v1548 = vunpack.c.l.b16 %v1523
        %v1549 = vpack.c.b16 %v1542, %v1541
        %v1550 = vpack.c.b16 %v1544, %v1543
        %v1551 = vpack.c.b16 %v1546, %v1545
        %v1552 = vpack.c.b16 %v1548, %v1547
        %v1573 = vunpack.c.l.b16 %v1525
        %v1574 = vunpack.c.l.b16 %v1526
        %v1575 = vunpack.c.l.b16 %v1527
        %v1576 = vunpack.c.l.b16 %v1528
        %v1577 = vunpack.c.l.b16 %v1529
        %v1578 = vunpack.c.l.b16 %v1530
        %v1579 = vunpack.c.l.b16 %v1531
        %v1580 = vunpack.c.l.b16 %v1532
        %v1581 = vunpack.c.l.b16 %v1533
        %v1582 = vunpack.c.l.b16 %v1534
        %v1583 = vunpack.c.l.b16 %v1535
        %v1584 = vunpack.c.l.b16 %v1536
        %v1585 = vunpack.c.l.b16 %v1537
        %v1586 = vunpack.c.l.b16 %v1538
        %v1587 = vunpack.c.l.b16 %v1539
        %v1588 = vunpack.c.l.b16 %v1540
        %v1589 = vpack.c.b16 %v1574, %v1573
        %v1590 = vpack.c.b16 %v1576, %v1575
        %v1591 = vpack.c.b16 %v1578, %v1577
        %v1592 = vpack.c.b16 %v1580, %v1579
        %v1593 = vpack.c.b16 %v1582, %v1581
        %v1594 = vpack.c.b16 %v1584, %v1583
        %v1595 = vpack.c.b16 %v1586, %v1585
        %v1596 = vpack.c.b16 %v1588, %v1587
        %1605 = vmatpush.bf16.msra.mxu0 %v1596
        %1606 = vmatpush.bf16.msra.mxu0 %v1595
        %1607 = vmatpush.bf16.msra.mxu0 %v1594
        %1608 = vmatpush.bf16.msra.mxu0 %v1593
        %1609 = vmatpush.bf16.msra.mxu0 %v1592
        %1610 = vmatpush.bf16.msra.mxu0 %v1591
        %1611 = vmatpush.bf16.msra.mxu0 %v1590
        %1612 = vmatpush.bf16.msra.mxu0 %v1589
        %1613 = vmatmul.bf16.gmra.mxu0 %v1549
        %v1614 = vpop.f32.mrf.mxu0
        %v1615 = vadd.f32 0.0, %v1614
        %v1616 = vpop.f32.mrf.mxu0
        %v1617 = vadd.f32 0.0, %v1616
        %1618 = vmatmul.bf16.gmra.mxu0 %v1550
        %v1619 = vpop.f32.mrf.mxu0
        %v1620 = vadd.f32 0.0, %v1619
        %v1621 = vpop.f32.mrf.mxu0
        %v1622 = vadd.f32 0.0, %v1621
        %1623 = vmatmul.bf16.gmra.mxu0 %v1551
        %v1624 = vpop.f32.mrf.mxu0
        %v1625 = vadd.f32 0.0, %v1624
        %v1626 = vpop.f32.mrf.mxu0
        %v1627 = vadd.f32 0.0, %v1626
        %1628 = vmatmul.bf16.gmra.mxu0 %v1552
        %v1629 = vpop.f32.mrf.mxu0
        %v1630 = vadd.f32 0.0, %v1629
        %v1631 = vpop.f32.mrf.mxu0
        %v1632 = vadd.f32 0.0, %v1631
        %1633 = vdwg.mxu0
        %v1634 = vadd.f32 %v1388, %v1615
        %v1635 = vadd.f32 %v1389, %v1617
        %v1636 = vadd.f32 %v1390, %v1620
        %v1637 = vadd.f32 %v1391, %v1622
        %v1638 = vadd.f32 %v1392, %v1625
        %v1639 = vadd.f32 %v1393, %v1627
        %v1640 = vadd.f32 %v1394, %v1630
        %v1641 = vadd.f32 %v1395, %v1632
        %v1642 = vld [vmem:[%s398] sm:$0xe]
        %v1643 = vld [vmem:[%s398 + $0x8] sm:$0xe]
        %v1644 = vld [vmem:[%s398 + $0x10] sm:$0xe]
        %v1645 = vld [vmem:[%s398 + $0x18] sm:$0xe]
        %v1646 = vld [vmem:[%s398 + $0x20] sm:$0xe]
        %v1647 = vld [vmem:[%s398 + $0x28] sm:$0xe]
        %v1648 = vld [vmem:[%s398 + $0x30] sm:$0xe]
        %v1649 = vld [vmem:[%s398 + $0x38] sm:$0xe]
        %v1666 = vrot.slane %v1642, 5
        %v1667 = vrot.slane %v1666, 4
        %v1668 = vrot.slane %v1397, 5
        %v1669 = vsel %vm1111, %v1667, %v1668
        %v1670 = vrot.slane %v1643, 5
        %v1671 = vrot.slane %v1670, 4
        %v1672 = vrot.slane %v1399, 5
        %v1673 = vsel %vm1111, %v1671, %v1672
        %v1674 = vrot.slane %v1644, 5
        %v1675 = vrot.slane %v1674, 4
        %v1676 = vrot.slane %v1401, 5
        %v1677 = vsel %vm1111, %v1675, %v1676
        %v1678 = vrot.slane %v1645, 5
        %v1679 = vrot.slane %v1678, 4
        %v1680 = vrot.slane %v1403, 5
        %v1681 = vsel %vm1111, %v1679, %v1680
        %v1682 = vrot.slane %v1646, 5
        %v1683 = vrot.slane %v1682, 4
        %v1684 = vrot.slane %v1405, 5
        %v1685 = vsel %vm1111, %v1683, %v1684
        %v1686 = vrot.slane %v1647, 5
        %v1687 = vrot.slane %v1686, 4
        %v1688 = vrot.slane %v1407, 5
        %v1689 = vsel %vm1111, %v1687, %v1688
        %v1690 = vrot.slane %v1648, 5
        %v1691 = vrot.slane %v1690, 4
        %v1692 = vrot.slane %v1409, 5
        %v1693 = vsel %vm1111, %v1691, %v1692
        %v1694 = vrot.slane %v1649, 5
        %v1695 = vrot.slane %v1694, 4
        %v1696 = vrot.slane %v1411, 5
        %v1697 = vsel %vm1111, %v1695, %v1696
        %s1698 = scalar_lea.vmem [#allocation8], 320
        %v1699 = vld [vmem:[%s1698] sm:$0xf]
        %v1700 = vld [vmem:[%s1698 + $0x4] sm:$0xf]
        %v1701 = vld [vmem:[%s1698 + $0x8] sm:$0xf]
        %v1702 = vld [vmem:[%s1698 + $0xc] sm:$0xf]
        %v1703 = vld [vmem:[%s1698 + $0x10] sm:$0xf]
        %v1704 = vld [vmem:[%s1698 + $0x14] sm:$0xf]
        %v1705 = vld [vmem:[%s1698 + $0x18] sm:$0xf]
        %v1706 = vld [vmem:[%s1698 + $0x1c] sm:$0xf]
        %v1707 = vld [vmem:[%s1698 + $0x20] sm:$0xf]
        %v1708 = vld [vmem:[%s1698 + $0x24] sm:$0xf]
        %v1709 = vld [vmem:[%s1698 + $0x28] sm:$0xf]
        %v1710 = vld [vmem:[%s1698 + $0x2c] sm:$0xf]
        %v1711 = vld [vmem:[%s1698 + $0x30] sm:$0xf]
        %v1712 = vld [vmem:[%s1698 + $0x34] sm:$0xf]
        %v1713 = vld [vmem:[%s1698 + $0x38] sm:$0xf]
        %v1714 = vld [vmem:[%s1698 + $0x3c] sm:$0xf]
        %v1715 = vunpack.c.l.b16 %v1669
        %v1716 = vunpack.c.l.b16 %v1673
        %v1717 = vunpack.c.l.b16 %v1677
        %v1718 = vunpack.c.l.b16 %v1681
        %v1719 = vunpack.c.l.b16 %v1685
        %v1720 = vunpack.c.l.b16 %v1689
        %v1721 = vunpack.c.l.b16 %v1693
        %v1722 = vunpack.c.l.b16 %v1697
        %v1723 = vpack.c.b16 %v1716, %v1715
        %v1724 = vpack.c.b16 %v1718, %v1717
        %v1725 = vpack.c.b16 %v1720, %v1719
        %v1726 = vpack.c.b16 %v1722, %v1721
        %v1747 = vunpack.c.l.b16 %v1699
        %v1748 = vunpack.c.l.b16 %v1700
        %v1749 = vunpack.c.l.b16 %v1701
        %v1750 = vunpack.c.l.b16 %v1702
        %v1751 = vunpack.c.l.b16 %v1703
        %v1752 = vunpack.c.l.b16 %v1704
        %v1753 = vunpack.c.l.b16 %v1705
        %v1754 = vunpack.c.l.b16 %v1706
        %v1755 = vunpack.c.l.b16 %v1707
        %v1756 = vunpack.c.l.b16 %v1708
        %v1757 = vunpack.c.l.b16 %v1709
        %v1758 = vunpack.c.l.b16 %v1710
        %v1759 = vunpack.c.l.b16 %v1711
        %v1760 = vunpack.c.l.b16 %v1712
        %v1761 = vunpack.c.l.b16 %v1713
        %v1762 = vunpack.c.l.b16 %v1714
        %v1763 = vpack.c.b16 %v1748, %v1747
        %v1764 = vpack.c.b16 %v1750, %v1749
        %v1765 = vpack.c.b16 %v1752, %v1751
        %v1766 = vpack.c.b16 %v1754, %v1753
        %v1767 = vpack.c.b16 %v1756, %v1755
        %v1768 = vpack.c.b16 %v1758, %v1757
        %v1769 = vpack.c.b16 %v1760, %v1759
        %v1770 = vpack.c.b16 %v1762, %v1761
        %1779 = vmatpush.bf16.msra.mxu0 %v1770
        %1780 = vmatpush.bf16.msra.mxu0 %v1769
        %1781 = vmatpush.bf16.msra.mxu0 %v1768
        %1782 = vmatpush.bf16.msra.mxu0 %v1767
        %1783 = vmatpush.bf16.msra.mxu0 %v1766
        %1784 = vmatpush.bf16.msra.mxu0 %v1765
        %1785 = vmatpush.bf16.msra.mxu0 %v1764
        %1786 = vmatpush.bf16.msra.mxu0 %v1763
        %1787 = vmatmul.bf16.gmra.mxu0 %v1723
        %v1788 = vpop.f32.mrf.mxu0
        %v1789 = vadd.f32 0.0, %v1788
        %v1790 = vpop.f32.mrf.mxu0
        %v1791 = vadd.f32 0.0, %v1790
        %1792 = vmatmul.bf16.gmra.mxu0 %v1724
        %v1793 = vpop.f32.mrf.mxu0
        %v1794 = vadd.f32 0.0, %v1793
        %v1795 = vpop.f32.mrf.mxu0
        %v1796 = vadd.f32 0.0, %v1795
        %1797 = vmatmul.bf16.gmra.mxu0 %v1725
        %v1798 = vpop.f32.mrf.mxu0
        %v1799 = vadd.f32 0.0, %v1798
        %v1800 = vpop.f32.mrf.mxu0
        %v1801 = vadd.f32 0.0, %v1800
        %1802 = vmatmul.bf16.gmra.mxu0 %v1726
        %v1803 = vpop.f32.mrf.mxu0
        %v1804 = vadd.f32 0.0, %v1803
        %v1805 = vpop.f32.mrf.mxu0
        %v1806 = vadd.f32 0.0, %v1805
        %1807 = vdwg.mxu0
        %v1808 = vadd.f32 %v1634, %v1789
        %v1809 = vadd.f32 %v1635, %v1791
        %v1810 = vadd.f32 %v1636, %v1794
        %v1811 = vadd.f32 %v1637, %v1796
        %v1812 = vadd.f32 %v1638, %v1799
        %v1813 = vadd.f32 %v1639, %v1801
        %v1814 = vadd.f32 %v1640, %v1804
        %v1815 = vadd.f32 %v1641, %v1806
        %s1816 = scalar_lea.vmem [#allocation2], 16
        %v1817 = vld [vmem:[%s1816] sm:$0xf]
        %v1818 = vld [vmem:[%s1816 + $0x8] sm:$0xf]
        %v1819 = vld [vmem:[%s1816 + $0x10] sm:$0xf]
        %v1820 = vld [vmem:[%s1816 + $0x18] sm:$0xf]
        %v1821 = vld [vmem:[%s1816 + $0x20] sm:$0xf]
        %v1822 = vld [vmem:[%s1816 + $0x28] sm:$0xf]
        %v1823 = vld [vmem:[%s1816 + $0x30] sm:$0xf]
        %v1824 = vld [vmem:[%s1816 + $0x38] sm:$0xf]
        %s1825 = scalar_lea.vmem [#allocation8], 384
        %v1826 = vld [vmem:[%s1825] sm:$0xf]
        %v1827 = vld [vmem:[%s1825 + $0x4] sm:$0xf]
        %v1828 = vld [vmem:[%s1825 + $0x8] sm:$0xf]
        %v1829 = vld [vmem:[%s1825 + $0xc] sm:$0xf]
        %v1830 = vld [vmem:[%s1825 + $0x10] sm:$0xf]
        %v1831 = vld [vmem:[%s1825 + $0x14] sm:$0xf]
        %v1832 = vld [vmem:[%s1825 + $0x18] sm:$0xf]
        %v1833 = vld [vmem:[%s1825 + $0x1c] sm:$0xf]
        %v1834 = vld [vmem:[%s1825 + $0x20] sm:$0xf]
        %v1835 = vld [vmem:[%s1825 + $0x24] sm:$0xf]
        %v1836 = vld [vmem:[%s1825 + $0x28] sm:$0xf]
        %v1837 = vld [vmem:[%s1825 + $0x2c] sm:$0xf]
        %v1838 = vld [vmem:[%s1825 + $0x30] sm:$0xf]
        %v1839 = vld [vmem:[%s1825 + $0x34] sm:$0xf]
        %v1840 = vld [vmem:[%s1825 + $0x38] sm:$0xf]
        %v1841 = vld [vmem:[%s1825 + $0x3c] sm:$0xf]
        %v1850 = vunpack.c.l.b16 %v1817
        %v1851 = vunpack.c.l.b16 %v1818
        %v1852 = vunpack.c.l.b16 %v1819
        %v1853 = vunpack.c.l.b16 %v1820
        %v1854 = vunpack.c.l.b16 %v1821
        %v1855 = vunpack.c.l.b16 %v1822
        %v1856 = vunpack.c.l.b16 %v1823
        %v1857 = vunpack.c.l.b16 %v1824
        %v1858 = vpack.c.b16 %v1851, %v1850
        %v1859 = vpack.c.b16 %v1853, %v1852
        %v1860 = vpack.c.b16 %v1855, %v1854
        %v1861 = vpack.c.b16 %v1857, %v1856
        %v1882 = vunpack.c.l.b16 %v1826
        %v1883 = vunpack.c.l.b16 %v1827
        %v1884 = vunpack.c.l.b16 %v1828
        %v1885 = vunpack.c.l.b16 %v1829
        %v1886 = vunpack.c.l.b16 %v1830
        %v1887 = vunpack.c.l.b16 %v1831
        %v1888 = vunpack.c.l.b16 %v1832
        %v1889 = vunpack.c.l.b16 %v1833
        %v1890 = vunpack.c.l.b16 %v1834
        %v1891 = vunpack.c.l.b16 %v1835
        %v1892 = vunpack.c.l.b16 %v1836
        %v1893 = vunpack.c.l.b16 %v1837
        %v1894 = vunpack.c.l.b16 %v1838
        %v1895 = vunpack.c.l.b16 %v1839
        %v1896 = vunpack.c.l.b16 %v1840
        %v1897 = vunpack.c.l.b16 %v1841
        %v1898 = vpack.c.b16 %v1883, %v1882
        %v1899 = vpack.c.b16 %v1885, %v1884
        %v1900 = vpack.c.b16 %v1887, %v1886
        %v1901 = vpack.c.b16 %v1889, %v1888
        %v1902 = vpack.c.b16 %v1891, %v1890
        %v1903 = vpack.c.b16 %v1893, %v1892
        %v1904 = vpack.c.b16 %v1895, %v1894
        %v1905 = vpack.c.b16 %v1897, %v1896
        %1914 = vmatpush.bf16.msra.mxu0 %v1905
        %1915 = vmatpush.bf16.msra.mxu0 %v1904
        %1916 = vmatpush.bf16.msra.mxu0 %v1903
        %1917 = vmatpush.bf16.msra.mxu0 %v1902
        %1918 = vmatpush.bf16.msra.mxu0 %v1901
        %1919 = vmatpush.bf16.msra.mxu0 %v1900
        %1920 = vmatpush.bf16.msra.mxu0 %v1899
        %1921 = vmatpush.bf16.msra.mxu0 %v1898
        %1922 = vmatmul.bf16.gmra.mxu0 %v1858
        %v1923 = vpop.f32.mrf.mxu0
        %v1924 = vadd.f32 0.0, %v1923
        %v1925 = vpop.f32.mrf.mxu0
        %v1926 = vadd.f32 0.0, %v1925
        %1927 = vmatmul.bf16.gmra.mxu0 %v1859
        %v1928 = vpop.f32.mrf.mxu0
        %v1929 = vadd.f32 0.0, %v1928
        %v1930 = vpop.f32.mrf.mxu0
        %v1931 = vadd.f32 0.0, %v1930
        %1932 = vmatmul.bf16.gmra.mxu0 %v1860
        %v1933 = vpop.f32.mrf.mxu0
        %v1934 = vadd.f32 0.0, %v1933
        %v1935 = vpop.f32.mrf.mxu0
        %v1936 = vadd.f32 0.0, %v1935
        %1937 = vmatmul.bf16.gmra.mxu0 %v1861
        %v1938 = vpop.f32.mrf.mxu0
        %v1939 = vadd.f32 0.0, %v1938
        %v1940 = vpop.f32.mrf.mxu0
        %v1941 = vadd.f32 0.0, %v1940
        %1942 = vdwg.mxu0
        %v1943 = vadd.f32 %v1808, %v1924
        %v1944 = vadd.f32 %v1809, %v1926
        %v1945 = vadd.f32 %v1810, %v1929
        %v1946 = vadd.f32 %v1811, %v1931
        %v1947 = vadd.f32 %v1812, %v1934
        %v1948 = vadd.f32 %v1813, %v1936
        %v1949 = vadd.f32 %v1814, %v1939
        %v1950 = vadd.f32 %v1815, %v1941
        %v1951 = vld [vmem:[%s1816] sm:$0xf]
        %v1952 = vld [vmem:[%s1816 + $0x4] sm:$0x1]
        %v1953 = vld [vmem:[%s1816 + $0x8] sm:$0xf]
        %v1954 = vld [vmem:[%s1816 + $0xc] sm:$0x1]
        %v1955 = vld [vmem:[%s1816 + $0x10] sm:$0xf]
        %v1956 = vld [vmem:[%s1816 + $0x14] sm:$0x1]
        %v1957 = vld [vmem:[%s1816 + $0x18] sm:$0xf]
        %v1958 = vld [vmem:[%s1816 + $0x1c] sm:$0x1]
        %v1959 = vld [vmem:[%s1816 + $0x20] sm:$0xf]
        %v1960 = vld [vmem:[%s1816 + $0x24] sm:$0x1]
        %v1961 = vld [vmem:[%s1816 + $0x28] sm:$0xf]
        %v1962 = vld [vmem:[%s1816 + $0x2c] sm:$0x1]
        %v1963 = vld [vmem:[%s1816 + $0x30] sm:$0xf]
        %v1964 = vld [vmem:[%s1816 + $0x34] sm:$0x1]
        %v1965 = vld [vmem:[%s1816 + $0x38] sm:$0xf]
        %v1966 = vld [vmem:[%s1816 + $0x3c] sm:$0x1]
        %v1968 = vshrl.u32 %v1951, 16
        %v1970 = vrot.slane %v1968, 4
        %v1971 = vshll.u32 %v1951, 16
        %v1973 = vrot.slane %v1971, 5
        %v1974 = vor.u32 %v1970, %v1973
        %v1975 = vrot.slane %v1974, 4
        %v1977 = vshll.u32 %v1952, 16
        %v1979 = vrot.slane %v1977, 5
        %v1980 = vsel %vm761, %v1975, %v1979
        %v1982 = vshrl.u32 %v1953, 16
        %v1984 = vrot.slane %v1982, 4
        %v1985 = vshll.u32 %v1953, 16
        %v1987 = vrot.slane %v1985, 5
        %v1988 = vor.u32 %v1984, %v1987
        %v1989 = vrot.slane %v1988, 4
        %v1991 = vshll.u32 %v1954, 16
        %v1993 = vrot.slane %v1991, 5
        %v1994 = vsel %vm761, %v1989, %v1993
        %v1996 = vshrl.u32 %v1955, 16
        %v1998 = vrot.slane %v1996, 4
        %v1999 = vshll.u32 %v1955, 16
        %v2001 = vrot.slane %v1999, 5
        %v2002 = vor.u32 %v1998, %v2001
        %v2003 = vrot.slane %v2002, 4
        %v2005 = vshll.u32 %v1956, 16
        %v2007 = vrot.slane %v2005, 5
        %v2008 = vsel %vm761, %v2003, %v2007
        %v2010 = vshrl.u32 %v1957, 16
        %v2012 = vrot.slane %v2010, 4
        %v2013 = vshll.u32 %v1957, 16
        %v2015 = vrot.slane %v2013, 5
        %v2016 = vor.u32 %v2012, %v2015
        %v2017 = vrot.slane %v2016, 4
        %v2019 = vshll.u32 %v1958, 16
        %v2021 = vrot.slane %v2019, 5
        %v2022 = vsel %vm761, %v2017, %v2021
        %v2024 = vshrl.u32 %v1959, 16
        %v2026 = vrot.slane %v2024, 4
        %v2027 = vshll.u32 %v1959, 16
        %v2029 = vrot.slane %v2027, 5
        %v2030 = vor.u32 %v2026, %v2029
        %v2031 = vrot.slane %v2030, 4
        %v2033 = vshll.u32 %v1960, 16
        %v2035 = vrot.slane %v2033, 5
        %v2036 = vsel %vm761, %v2031, %v2035
        %v2038 = vshrl.u32 %v1961, 16
        %v2040 = vrot.slane %v2038, 4
        %v2041 = vshll.u32 %v1961, 16
        %v2043 = vrot.slane %v2041, 5
        %v2044 = vor.u32 %v2040, %v2043
        %v2045 = vrot.slane %v2044, 4
        %v2047 = vshll.u32 %v1962, 16
        %v2049 = vrot.slane %v2047, 5
        %v2050 = vsel %vm761, %v2045, %v2049
        %v2052 = vshrl.u32 %v1963, 16
        %v2054 = vrot.slane %v2052, 4
        %v2055 = vshll.u32 %v1963, 16
        %v2057 = vrot.slane %v2055, 5
        %v2058 = vor.u32 %v2054, %v2057
        %v2059 = vrot.slane %v2058, 4
        %v2061 = vshll.u32 %v1964, 16
        %v2063 = vrot.slane %v2061, 5
        %v2064 = vsel %vm761, %v2059, %v2063
        %v2066 = vshrl.u32 %v1965, 16
        %v2068 = vrot.slane %v2066, 4
        %v2069 = vshll.u32 %v1965, 16
        %v2071 = vrot.slane %v2069, 5
        %v2072 = vor.u32 %v2068, %v2071
        %v2073 = vrot.slane %v2072, 4
        %v2075 = vshll.u32 %v1966, 16
        %v2077 = vrot.slane %v2075, 5
        %v2078 = vsel %vm761, %v2073, %v2077
        %s2079 = scalar_lea.vmem [#allocation8], 448
        %v2080 = vld [vmem:[%s2079] sm:$0xf]
        %v2081 = vld [vmem:[%s2079 + $0x4] sm:$0xf]
        %v2082 = vld [vmem:[%s2079 + $0x8] sm:$0xf]
        %v2083 = vld [vmem:[%s2079 + $0xc] sm:$0xf]
        %v2084 = vld [vmem:[%s2079 + $0x10] sm:$0xf]
        %v2085 = vld [vmem:[%s2079 + $0x14] sm:$0xf]
        %v2086 = vld [vmem:[%s2079 + $0x18] sm:$0xf]
        %v2087 = vld [vmem:[%s2079 + $0x1c] sm:$0xf]
        %v2088 = vld [vmem:[%s2079 + $0x20] sm:$0xf]
        %v2089 = vld [vmem:[%s2079 + $0x24] sm:$0xf]
        %v2090 = vld [vmem:[%s2079 + $0x28] sm:$0xf]
        %v2091 = vld [vmem:[%s2079 + $0x2c] sm:$0xf]
        %v2092 = vld [vmem:[%s2079 + $0x30] sm:$0xf]
        %v2093 = vld [vmem:[%s2079 + $0x34] sm:$0xf]
        %v2094 = vld [vmem:[%s2079 + $0x38] sm:$0xf]
        %v2095 = vld [vmem:[%s2079 + $0x3c] sm:$0xf]
        %v2096 = vunpack.c.l.b16 %v1980
        %v2097 = vunpack.c.l.b16 %v1994
        %v2098 = vunpack.c.l.b16 %v2008
        %v2099 = vunpack.c.l.b16 %v2022
        %v2100 = vunpack.c.l.b16 %v2036
        %v2101 = vunpack.c.l.b16 %v2050
        %v2102 = vunpack.c.l.b16 %v2064
        %v2103 = vunpack.c.l.b16 %v2078
        %v2104 = vpack.c.b16 %v2097, %v2096
        %v2105 = vpack.c.b16 %v2099, %v2098
        %v2106 = vpack.c.b16 %v2101, %v2100
        %v2107 = vpack.c.b16 %v2103, %v2102
        %v2128 = vunpack.c.l.b16 %v2080
        %v2129 = vunpack.c.l.b16 %v2081
        %v2130 = vunpack.c.l.b16 %v2082
        %v2131 = vunpack.c.l.b16 %v2083
        %v2132 = vunpack.c.l.b16 %v2084
        %v2133 = vunpack.c.l.b16 %v2085
        %v2134 = vunpack.c.l.b16 %v2086
        %v2135 = vunpack.c.l.b16 %v2087
        %v2136 = vunpack.c.l.b16 %v2088
        %v2137 = vunpack.c.l.b16 %v2089
        %v2138 = vunpack.c.l.b16 %v2090
        %v2139 = vunpack.c.l.b16 %v2091
        %v2140 = vunpack.c.l.b16 %v2092
        %v2141 = vunpack.c.l.b16 %v2093
        %v2142 = vunpack.c.l.b16 %v2094
        %v2143 = vunpack.c.l.b16 %v2095
        %v2144 = vpack.c.b16 %v2129, %v2128
        %v2145 = vpack.c.b16 %v2131, %v2130
        %v2146 = vpack.c.b16 %v2133, %v2132
        %v2147 = vpack.c.b16 %v2135, %v2134
        %v2148 = vpack.c.b16 %v2137, %v2136
        %v2149 = vpack.c.b16 %v2139, %v2138
        %v2150 = vpack.c.b16 %v2141, %v2140
        %v2151 = vpack.c.b16 %v2143, %v2142
        %2160 = vmatpush.bf16.msra.mxu0 %v2151
        %2161 = vmatpush.bf16.msra.mxu0 %v2150
        %2162 = vmatpush.bf16.msra.mxu0 %v2149
        %2163 = vmatpush.bf16.msra.mxu0 %v2148
        %2164 = vmatpush.bf16.msra.mxu0 %v2147
        %2165 = vmatpush.bf16.msra.mxu0 %v2146
        %2166 = vmatpush.bf16.msra.mxu0 %v2145
        %2167 = vmatpush.bf16.msra.mxu0 %v2144
        %2168 = vmatmul.bf16.gmra.mxu0 %v2104
        %v2169 = vpop.f32.mrf.mxu0
        %v2170 = vadd.f32 0.0, %v2169
        %v2171 = vpop.f32.mrf.mxu0
        %v2172 = vadd.f32 0.0, %v2171
        %2173 = vmatmul.bf16.gmra.mxu0 %v2105
        %v2174 = vpop.f32.mrf.mxu0
        %v2175 = vadd.f32 0.0, %v2174
        %v2176 = vpop.f32.mrf.mxu0
        %v2177 = vadd.f32 0.0, %v2176
        %2178 = vmatmul.bf16.gmra.mxu0 %v2106
        %v2179 = vpop.f32.mrf.mxu0
        %v2180 = vadd.f32 0.0, %v2179
        %v2181 = vpop.f32.mrf.mxu0
        %v2182 = vadd.f32 0.0, %v2181
        %2183 = vmatmul.bf16.gmra.mxu0 %v2107
        %v2184 = vpop.f32.mrf.mxu0
        %v2185 = vadd.f32 0.0, %v2184
        %v2186 = vpop.f32.mrf.mxu0
        %v2187 = vadd.f32 0.0, %v2186
        %2188 = vdwg.mxu0
        %v2189 = vadd.f32 %v1943, %v2170
        %v2190 = vadd.f32 %v1944, %v2172
        %v2191 = vadd.f32 %v1945, %v2175
        %v2192 = vadd.f32 %v1946, %v2177
        %v2193 = vadd.f32 %v1947, %v2180
        %v2194 = vadd.f32 %v1948, %v2182
        %v2195 = vadd.f32 %v1949, %v2185
        %v2196 = vadd.f32 %v1950, %v2187
        %v2197 = vld [vmem:[%s1816] sm:$0xe]
        %v2198 = vld [vmem:[%s1816 + $0x8] sm:$0xe]
        %v2199 = vld [vmem:[%s1816 + $0x10] sm:$0xe]
        %v2200 = vld [vmem:[%s1816 + $0x18] sm:$0xe]
        %v2201 = vld [vmem:[%s1816 + $0x20] sm:$0xe]
        %v2202 = vld [vmem:[%s1816 + $0x28] sm:$0xe]
        %v2203 = vld [vmem:[%s1816 + $0x30] sm:$0xe]
        %v2204 = vld [vmem:[%s1816 + $0x38] sm:$0xe]
        %v2221 = vrot.slane %v2197, 5
        %v2222 = vrot.slane %v2221, 4
        %v2223 = vrot.slane %v1952, 5
        %v2224 = vsel %vm1111, %v2222, %v2223
        %v2225 = vrot.slane %v2198, 5
        %v2226 = vrot.slane %v2225, 4
        %v2227 = vrot.slane %v1954, 5
        %v2228 = vsel %vm1111, %v2226, %v2227
        %v2229 = vrot.slane %v2199, 5
        %v2230 = vrot.slane %v2229, 4
        %v2231 = vrot.slane %v1956, 5
        %v2232 = vsel %vm1111, %v2230, %v2231
        %v2233 = vrot.slane %v2200, 5
        %v2234 = vrot.slane %v2233, 4
        %v2235 = vrot.slane %v1958, 5
        %v2236 = vsel %vm1111, %v2234, %v2235
        %v2237 = vrot.slane %v2201, 5
        %v2238 = vrot.slane %v2237, 4
        %v2239 = vrot.slane %v1960, 5
        %v2240 = vsel %vm1111, %v2238, %v2239
        %v2241 = vrot.slane %v2202, 5
        %v2242 = vrot.slane %v2241, 4
        %v2243 = vrot.slane %v1962, 5
        %v2244 = vsel %vm1111, %v2242, %v2243
        %v2245 = vrot.slane %v2203, 5
        %v2246 = vrot.slane %v2245, 4
        %v2247 = vrot.slane %v1964, 5
        %v2248 = vsel %vm1111, %v2246, %v2247
        %v2249 = vrot.slane %v2204, 5
        %v2250 = vrot.slane %v2249, 4
        %v2251 = vrot.slane %v1966, 5
        %v2252 = vsel %vm1111, %v2250, %v2251
        %s2253 = scalar_lea.vmem [#allocation8], 512
        %v2254 = vld [vmem:[%s2253] sm:$0xf]
        %v2255 = vld [vmem:[%s2253 + $0x4] sm:$0xf]
        %v2256 = vld [vmem:[%s2253 + $0x8] sm:$0xf]
        %v2257 = vld [vmem:[%s2253 + $0xc] sm:$0xf]
        %v2258 = vld [vmem:[%s2253 + $0x10] sm:$0xf]
        %v2259 = vld [vmem:[%s2253 + $0x14] sm:$0xf]
        %v2260 = vld [vmem:[%s2253 + $0x18] sm:$0xf]
        %v2261 = vld [vmem:[%s2253 + $0x1c] sm:$0xf]
        %v2262 = vld [vmem:[%s2253 + $0x20] sm:$0xf]
        %v2263 = vld [vmem:[%s2253 + $0x24] sm:$0xf]
        %v2264 = vld [vmem:[%s2253 + $0x28] sm:$0xf]
        %v2265 = vld [vmem:[%s2253 + $0x2c] sm:$0xf]
        %v2266 = vld [vmem:[%s2253 + $0x30] sm:$0xf]
        %v2267 = vld [vmem:[%s2253 + $0x34] sm:$0xf]
        %v2268 = vld [vmem:[%s2253 + $0x38] sm:$0xf]
        %v2269 = vld [vmem:[%s2253 + $0x3c] sm:$0xf]
        %v2270 = vunpack.c.l.b16 %v2224
        %v2271 = vunpack.c.l.b16 %v2228
        %v2272 = vunpack.c.l.b16 %v2232
        %v2273 = vunpack.c.l.b16 %v2236
        %v2274 = vunpack.c.l.b16 %v2240
        %v2275 = vunpack.c.l.b16 %v2244
        %v2276 = vunpack.c.l.b16 %v2248
        %v2277 = vunpack.c.l.b16 %v2252
        %v2278 = vpack.c.b16 %v2271, %v2270
        %v2279 = vpack.c.b16 %v2273, %v2272
        %v2280 = vpack.c.b16 %v2275, %v2274
        %v2281 = vpack.c.b16 %v2277, %v2276
        %v2302 = vunpack.c.l.b16 %v2254
        %v2303 = vunpack.c.l.b16 %v2255
        %v2304 = vunpack.c.l.b16 %v2256
        %v2305 = vunpack.c.l.b16 %v2257
        %v2306 = vunpack.c.l.b16 %v2258
        %v2307 = vunpack.c.l.b16 %v2259
        %v2308 = vunpack.c.l.b16 %v2260
        %v2309 = vunpack.c.l.b16 %v2261
        %v2310 = vunpack.c.l.b16 %v2262
        %v2311 = vunpack.c.l.b16 %v2263
        %v2312 = vunpack.c.l.b16 %v2264
        %v2313 = vunpack.c.l.b16 %v2265
        %v2314 = vunpack.c.l.b16 %v2266
        %v2315 = vunpack.c.l.b16 %v2267
        %v2316 = vunpack.c.l.b16 %v2268
        %v2317 = vunpack.c.l.b16 %v2269
        %v2318 = vpack.c.b16 %v2303, %v2302
        %v2319 = vpack.c.b16 %v2305, %v2304
        %v2320 = vpack.c.b16 %v2307, %v2306
        %v2321 = vpack.c.b16 %v2309, %v2308
        %v2322 = vpack.c.b16 %v2311, %v2310
        %v2323 = vpack.c.b16 %v2313, %v2312
        %v2324 = vpack.c.b16 %v2315, %v2314
        %v2325 = vpack.c.b16 %v2317, %v2316
        %2334 = vmatpush.bf16.msra.mxu0 %v2325
        %2335 = vmatpush.bf16.msra.mxu0 %v2324
        %2336 = vmatpush.bf16.msra.mxu0 %v2323
        %2337 = vmatpush.bf16.msra.mxu0 %v2322
        %2338 = vmatpush.bf16.msra.mxu0 %v2321
        %2339 = vmatpush.bf16.msra.mxu0 %v2320
        %2340 = vmatpush.bf16.msra.mxu0 %v2319
        %2341 = vmatpush.bf16.msra.mxu0 %v2318
        %2342 = vmatmul.bf16.gmra.mxu0 %v2278
        %v2343 = vpop.f32.mrf.mxu0
        %v2344 = vadd.f32 0.0, %v2343
        %v2345 = vpop.f32.mrf.mxu0
        %v2346 = vadd.f32 0.0, %v2345
        %2347 = vmatmul.bf16.gmra.mxu0 %v2279
        %v2348 = vpop.f32.mrf.mxu0
        %v2349 = vadd.f32 0.0, %v2348
        %v2350 = vpop.f32.mrf.mxu0
        %v2351 = vadd.f32 0.0, %v2350
        %2352 = vmatmul.bf16.gmra.mxu0 %v2280
        %v2353 = vpop.f32.mrf.mxu0
        %v2354 = vadd.f32 0.0, %v2353
        %v2355 = vpop.f32.mrf.mxu0
        %v2356 = vadd.f32 0.0, %v2355
        %2357 = vmatmul.bf16.gmra.mxu0 %v2281
        %v2358 = vpop.f32.mrf.mxu0
        %v2359 = vadd.f32 0.0, %v2358
        %v2360 = vpop.f32.mrf.mxu0
        %v2361 = vadd.f32 0.0, %v2360
        %2362 = vdwg.mxu0
        %v2363 = vadd.f32 %v2189, %v2344
        %v2364 = vadd.f32 %v2190, %v2346
        %v2365 = vadd.f32 %v2191, %v2349
        %v2366 = vadd.f32 %v2192, %v2351
        %v2367 = vadd.f32 %v2193, %v2354
        %v2368 = vadd.f32 %v2194, %v2356
        %v2369 = vadd.f32 %v2195, %v2359
        %v2370 = vadd.f32 %v2196, %v2361
        %v2371 = vld [vmem:[%s4] sm:$0x1]
        %v2373 = vperm.slane %v2371, 0
        %v2375 = vadd.f32 %v2363, %v2373
        %v2376 = vadd.f32 %v2364, %v2373
        %v2377 = vadd.f32 %v2365, %v2373
        %v2378 = vadd.f32 %v2366, %v2373
        %v2379 = vadd.f32 %v2367, %v2373
        %v2380 = vadd.f32 %v2368, %v2373
        %v2381 = vadd.f32 %v2369, %v2373
        %v2382 = vadd.f32 %v2370, %v2373
        %v2383 = vmax.f32 %v2375, 0.0
        %v2384 = vmax.f32 %v2376, 0.0
        %v2385 = vmax.f32 %v2377, 0.0
        %v2386 = vmax.f32 %v2378, 0.0
        %v2387 = vmax.f32 %v2379, 0.0
        %v2388 = vmax.f32 %v2380, 0.0
        %v2389 = vmax.f32 %v2381, 0.0
        %v2390 = vmax.f32 %v2382, 0.0
        %v2391 = vpack.c.bf16 %v2384, %v2383
        %v2392 = vpack.c.bf16 %v2386, %v2385
        %v2393 = vpack.c.bf16 %v2388, %v2387
        %v2394 = vpack.c.bf16 %v2390, %v2389
        %v2395 = vld [vmem:[%s338] sm:$0xf]
        %v2396 = vld [vmem:[%s338 + $0x4] sm:$0xf]
        %v2397 = vld [vmem:[%s338 + $0x8] sm:$0xf]
        %v2398 = vld [vmem:[%s338 + $0xc] sm:$0xf]
        %v2399 = vld [vmem:[%s338 + $0x10] sm:$0xf]
        %v2400 = vld [vmem:[%s338 + $0x14] sm:$0xf]
        %v2401 = vld [vmem:[%s338 + $0x18] sm:$0xf]
        %v2402 = vld [vmem:[%s338 + $0x1c] sm:$0xf]
        %v2403 = vld [vmem:[#allocation9] sm:$0xf]
        %v2404 = vld [vmem:[#allocation9 + $0x4] sm:$0xf]
        %v2405 = vld [vmem:[#allocation9 + $0x8] sm:$0xf]
        %v2406 = vld [vmem:[#allocation9 + $0xc] sm:$0xf]
        %v2407 = vld [vmem:[#allocation9 + $0x10] sm:$0xf]
        %v2408 = vld [vmem:[#allocation9 + $0x14] sm:$0xf]
        %v2409 = vld [vmem:[#allocation9 + $0x18] sm:$0xf]
        %v2410 = vld [vmem:[#allocation9 + $0x1c] sm:$0xf]
        %v2411 = vld [vmem:[#allocation9 + $0x20] sm:$0xf]
        %v2412 = vld [vmem:[#allocation9 + $0x24] sm:$0xf]
        %v2413 = vld [vmem:[#allocation9 + $0x28] sm:$0xf]
        %v2414 = vld [vmem:[#allocation9 + $0x2c] sm:$0xf]
        %v2415 = vld [vmem:[#allocation9 + $0x30] sm:$0xf]
        %v2416 = vld [vmem:[#allocation9 + $0x34] sm:$0xf]
        %v2417 = vld [vmem:[#allocation9 + $0x38] sm:$0xf]
        %v2418 = vld [vmem:[#allocation9 + $0x3c] sm:$0xf]
        %v2419 = vld [vmem:[#allocation11] sm:$0xf]
        %v2420 = vld [vmem:[#allocation11 + $0x4] sm:$0xf]
        %v2421 = vld [vmem:[#allocation11 + $0x8] sm:$0xf]
        %v2422 = vld [vmem:[#allocation11 + $0xc] sm:$0xf]
        %v2423 = vld [vmem:[#allocation11 + $0x10] sm:$0xf]
        %v2424 = vld [vmem:[#allocation11 + $0x14] sm:$0xf]
        %v2425 = vld [vmem:[#allocation11 + $0x18] sm:$0xf]
        %v2426 = vld [vmem:[#allocation11 + $0x1c] sm:$0xf]
        %v2427 = vld [vmem:[#allocation11 + $0x20] sm:$0xf]
        %v2428 = vld [vmem:[#allocation11 + $0x24] sm:$0xf]
        %v2429 = vld [vmem:[#allocation11 + $0x28] sm:$0xf]
        %v2430 = vld [vmem:[#allocation11 + $0x2c] sm:$0xf]
        %v2431 = vld [vmem:[#allocation11 + $0x30] sm:$0xf]
        %v2432 = vld [vmem:[#allocation11 + $0x34] sm:$0xf]
        %v2433 = vld [vmem:[#allocation11 + $0x38] sm:$0xf]
        %v2434 = vld [vmem:[#allocation11 + $0x3c] sm:$0xf]
        %v2443 = vunpack.c.l.b16 %v2395
        %v2444 = vunpack.c.l.b16 %v2396
        %v2445 = vunpack.c.l.b16 %v2397
        %v2446 = vunpack.c.l.b16 %v2398
        %v2447 = vunpack.c.l.b16 %v2399
        %v2448 = vunpack.c.l.b16 %v2400
        %v2449 = vunpack.c.l.b16 %v2401
        %v2450 = vunpack.c.l.b16 %v2402
        %v2451 = vpack.c.b16 %v2444, %v2443
        %v2452 = vpack.c.b16 %v2446, %v2445
        %v2453 = vpack.c.b16 %v2448, %v2447
        %v2454 = vpack.c.b16 %v2450, %v2449
        %v2475 = vunpack.c.l.b16 %v2419
        %v2476 = vunpack.c.l.b16 %v2420
        %v2477 = vunpack.c.l.b16 %v2421
        %v2478 = vunpack.c.l.b16 %v2422
        %v2479 = vunpack.c.l.b16 %v2423
        %v2480 = vunpack.c.l.b16 %v2424
        %v2481 = vunpack.c.l.b16 %v2425
        %v2482 = vunpack.c.l.b16 %v2426
        %v2483 = vunpack.c.l.b16 %v2427
        %v2484 = vunpack.c.l.b16 %v2428
        %v2485 = vunpack.c.l.b16 %v2429
        %v2486 = vunpack.c.l.b16 %v2430
        %v2487 = vunpack.c.l.b16 %v2431
        %v2488 = vunpack.c.l.b16 %v2432
        %v2489 = vunpack.c.l.b16 %v2433
        %v2490 = vunpack.c.l.b16 %v2434
        %v2491 = vpack.c.b16 %v2476, %v2475
        %v2492 = vpack.c.b16 %v2478, %v2477
        %v2493 = vpack.c.b16 %v2480, %v2479
        %v2494 = vpack.c.b16 %v2482, %v2481
        %v2495 = vpack.c.b16 %v2484, %v2483
        %v2496 = vpack.c.b16 %v2486, %v2485
        %v2497 = vpack.c.b16 %v2488, %v2487
        %v2498 = vpack.c.b16 %v2490, %v2489
        %2507 = vmatpush.bf16.msra.mxu0 %v2498
        %2508 = vmatpush.bf16.msra.mxu0 %v2497
        %2509 = vmatpush.bf16.msra.mxu0 %v2496
        %2510 = vmatpush.bf16.msra.mxu0 %v2495
        %2511 = vmatpush.bf16.msra.mxu0 %v2494
        %2512 = vmatpush.bf16.msra.mxu0 %v2493
        %2513 = vmatpush.bf16.msra.mxu0 %v2492
        %2514 = vmatpush.bf16.msra.mxu0 %v2491
        %2515 = vmatmul.bf16.gmra.mxu0 %v2451
        %v2516 = vpop.f32.mrf.mxu0
        %v2517 = vadd.f32 0.0, %v2516
        %v2518 = vpop.f32.mrf.mxu0
        %v2519 = vadd.f32 0.0, %v2518
        %2520 = vmatmul.bf16.gmra.mxu0 %v2452
        %v2521 = vpop.f32.mrf.mxu0
        %v2522 = vadd.f32 0.0, %v2521
        %v2523 = vpop.f32.mrf.mxu0
        %v2524 = vadd.f32 0.0, %v2523
        %2525 = vmatmul.bf16.gmra.mxu0 %v2453
        %v2526 = vpop.f32.mrf.mxu0
        %v2527 = vadd.f32 0.0, %v2526
        %v2528 = vpop.f32.mrf.mxu0
        %v2529 = vadd.f32 0.0, %v2528
        %2530 = vmatmul.bf16.gmra.mxu0 %v2454
        %v2531 = vpop.f32.mrf.mxu0
        %v2532 = vadd.f32 0.0, %v2531
        %v2533 = vpop.f32.mrf.mxu0
        %v2534 = vadd.f32 0.0, %v2533
        %2535 = vdwg.mxu0
        %v2552 = vunpack.c.l.b16 %v2403
        %v2553 = vunpack.c.l.b16 %v2404
        %v2554 = vunpack.c.l.b16 %v2405
        %v2555 = vunpack.c.l.b16 %v2406
        %v2556 = vunpack.c.l.b16 %v2407
        %v2557 = vunpack.c.l.b16 %v2408
        %v2558 = vunpack.c.l.b16 %v2409
        %v2559 = vunpack.c.l.b16 %v2410
        %v2560 = vunpack.c.l.b16 %v2411
        %v2561 = vunpack.c.l.b16 %v2412
        %v2562 = vunpack.c.l.b16 %v2413
        %v2563 = vunpack.c.l.b16 %v2414
        %v2564 = vunpack.c.l.b16 %v2415
        %v2565 = vunpack.c.l.b16 %v2416
        %v2566 = vunpack.c.l.b16 %v2417
        %v2567 = vunpack.c.l.b16 %v2418
        %v2568 = vpack.c.b16 %v2553, %v2552
        %v2569 = vpack.c.b16 %v2555, %v2554
        %v2570 = vpack.c.b16 %v2557, %v2556
        %v2571 = vpack.c.b16 %v2559, %v2558
        %v2572 = vpack.c.b16 %v2561, %v2560
        %v2573 = vpack.c.b16 %v2563, %v2562
        %v2574 = vpack.c.b16 %v2565, %v2564
        %v2575 = vpack.c.b16 %v2567, %v2566
        %2584 = vmatpush.bf16.msra.mxu0 %v2575
        %2585 = vmatpush.bf16.msra.mxu0 %v2574
        %2586 = vmatpush.bf16.msra.mxu0 %v2573
        %2587 = vmatpush.bf16.msra.mxu0 %v2572
        %2588 = vmatpush.bf16.msra.mxu0 %v2571
        %2589 = vmatpush.bf16.msra.mxu0 %v2570
        %2590 = vmatpush.bf16.msra.mxu0 %v2569
        %2591 = vmatpush.bf16.msra.mxu0 %v2568
        %2592 = vmatmul.bf16.gmra.mxu0 %v2391
        %v2593 = vpop.f32.mrf.mxu0
        %v2594 = vadd.f32 %v2517, %v2593
        %v2595 = vpop.f32.mrf.mxu0
        %v2596 = vadd.f32 %v2519, %v2595
        %2597 = vmatmul.bf16.gmra.mxu0 %v2392
        %v2598 = vpop.f32.mrf.mxu0
        %v2599 = vadd.f32 %v2522, %v2598
        %v2600 = vpop.f32.mrf.mxu0
        %v2601 = vadd.f32 %v2524, %v2600
        %2602 = vmatmul.bf16.gmra.mxu0 %v2393
        %v2603 = vpop.f32.mrf.mxu0
        %v2604 = vadd.f32 %v2527, %v2603
        %v2605 = vpop.f32.mrf.mxu0
        %v2606 = vadd.f32 %v2529, %v2605
        %2607 = vmatmul.bf16.gmra.mxu0 %v2394
        %v2608 = vpop.f32.mrf.mxu0
        %v2609 = vadd.f32 %v2532, %v2608
        %v2610 = vpop.f32.mrf.mxu0
        %v2611 = vadd.f32 %v2534, %v2610
        %2612 = vdwg.mxu0
        %v2613 = vld [vmem:[%s7] sm:$0x1]
        %v2615 = vperm.slane %v2613, 0
        %v2617 = vadd.f32 %v2594, %v2615
        %v2618 = vadd.f32 %v2596, %v2615
        %v2619 = vadd.f32 %v2599, %v2615
        %v2620 = vadd.f32 %v2601, %v2615
        %v2621 = vadd.f32 %v2604, %v2615
        %v2622 = vadd.f32 %v2606, %v2615
        %v2623 = vadd.f32 %v2609, %v2615
        %v2624 = vadd.f32 %v2611, %v2615
        %v2625 = vmax.f32 %v2617, 0.0
        %v2626 = vmax.f32 %v2618, 0.0
        %v2627 = vmax.f32 %v2619, 0.0
        %v2628 = vmax.f32 %v2620, 0.0
        %v2629 = vmax.f32 %v2621, 0.0
        %v2630 = vmax.f32 %v2622, 0.0
        %v2631 = vmax.f32 %v2623, 0.0
        %v2632 = vmax.f32 %v2624, 0.0
        %v2633 = vpack.c.bf16 %v2625, %v2625
        %v2634 = vpack.c.bf16 %v2626, %v2626
        %v2635 = vpack.c.bf16 %v2627, %v2627
        %v2636 = vpack.c.bf16 %v2628, %v2628
        %v2637 = vpack.c.bf16 %v2629, %v2629
        %v2638 = vpack.c.bf16 %v2630, %v2630
        %v2639 = vpack.c.bf16 %v2631, %v2631
        %v2640 = vpack.c.bf16 %v2632, %v2632
        %2641 = vst [vmem:[%s391] sm:$0xf] %v2633
        %2642 = vst [vmem:[%s391 + $0x4] sm:$0xf] %v2634
        %2643 = vst [vmem:[%s391 + $0x8] sm:$0xf] %v2635
        %2644 = vst [vmem:[%s391 + $0xc] sm:$0xf] %v2636
        %2645 = vst [vmem:[%s391 + $0x10] sm:$0xf] %v2637
        %2646 = vst [vmem:[%s391 + $0x14] sm:$0xf] %v2638
        %2647 = vst [vmem:[%s391 + $0x18] sm:$0xf] %v2639
        %2648 = vst [vmem:[%s391 + $0x1c] sm:$0xf] %v2640
        %s2649 = sand.u32 %s208, 1
        %s2650 = scalar_lea.sflag [#allocation5], %s2649
        %s2651 = sand.u32 %s208, 1
        %s2652 = smul.addr %s2651, 32
        %s2653 = scalar_lea.vmem [#allocation12], %s2652
        // Predicated region
        $region73: #{tpu_custom_call.1} parent=51 // pred_check
          %p2654 = pneg %p218
        $region74: #{tpu_custom_call.1} parent=51 // pred_check_branch
          %2656 = sbr.rel (%p2654) target = $region76
        $region75: #{tpu_custom_call.1} parent=51 // pred_region
          %2658 = vsyncadd %s2650, 0
          %s2659 = smul.addr %s27, 8
          %s2660 = smul.addr %s2659, 4
          %s2661 = scalar_lea.hbm %s8, %s2660
          %s2662 = sshll.u32 %s2653, 4
          %s2663 = int_to_ptr.vmem [resolvable:$true] %s2662
          %s2664 = sshll.u32 %s2661, 4
          %s2665 = int_to_ptr.hbm [resolvable:$true] %s2664
          %2670 = dma.vmem_to_hbm [thread:$0]  %s2663, 512, %s2665, %s2650, 64, 64, 4
        $region76: #{tpu_custom_call.1} parent=51 // pred_fallthru
          _
      $region52: #{tpu_custom_call.1} parent=5 // pred_fallthru
        _
      %p2671 = scmp.le.s32.totalorder 2, %s22
      // Predicated region
      $region77: #{tpu_custom_call.1} parent=5 // pred_check
        %p2672 = pneg %p2671
      $region78: #{tpu_custom_call.1} parent=5 // pred_check_branch
        %2674 = sbr.rel (%p2672) target = $region80
      $region79: #{tpu_custom_call.1} parent=5 // pred_region
        %s2675 = ssub.s32 %s22, 2
        // Predicated region
        $region81: #{tpu_custom_call.1} parent=79 // pred_check
          %p2676 = pneg %p224
        $region82: #{tpu_custom_call.1} parent=79 // pred_check_branch
          %2678 = sbr.rel (%p2676) target = $region84
        $region83: #{tpu_custom_call.1} parent=79 // pred_region
          %s2679 = sand.u32 %s209, 1
          %s2680 = scalar_lea.sflag [#allocation5], %s2679
          %s2681 = sand.u32 %s209, 1
          %s2682 = smul.addr %s2681, 32
          %s2683 = scalar_lea.vmem [#allocation12], %s2682
          %2685 = dma.done %s2680, 512
        $region84: #{tpu_custom_call.1} parent=79 // pred_fallthru
          _
      $region80: #{tpu_custom_call.1} parent=5 // pred_fallthru
        _
    $region6: #{tpu_custom_call.1} parent=1 // loop_footer
      %s26 = sadd.s32 1, %s22
    $region7: #{tpu_custom_call.1} parent=1 // loop_footer_branch
      %21 = sbr.rel target = $region3
    $region8: #{tpu_custom_call.1} parent=1 // loop_exit
      _
    %2686 = vsyncpa [#allocation4], 1
    %s2687 = scalar_lea.sflag [#allocation4], 1
    %2688 = vsyncpa %s2687, 1
    %2689 = vsyncpa [#allocation7], 1
    %2690 = vsyncpa [#allocation10], 1
    %2691 = vsyncpa [#allocation5], 1
    %s2692 = scalar_lea.sflag [#allocation5], 1
    %2693 = vsyncpa %s2692, 1

</llo_original>
